<compile_context>
chip_gen: v5e
topology: v5e:2x2
jax: 0.10.0
libtpu: 0.0.40
codegen_flags: <defaults>
</compile_context>

<pallas_src>
import functools
import math

import jax
import jax.numpy as jnp
from jax.experimental import pallas as pl
from jax.experimental.pallas import tpu as pltpu

D_IN = 3          # point_dimension
D_IN_PAD = 8      # zero-padded contraction dim for the first matmul
C1, C2, C3, C4, C5 = 64, 64, 64, 128, 256


# ---------------------------------------------------------------------------
# Kernel: 5-layer pointwise MLP on a (channels, TN-points) tile.
# ---------------------------------------------------------------------------
def _pointnet_kernel(x_ref,
                     w1_ref, b1_ref, w2_ref, b2_ref, w3_ref, b3_ref,
                     w4_ref, b4_ref, w5_ref, b5_ref,
                     o_ref, *, bf16_epilogue):
    def hidden(h, w_ref, b_ref):
        # (C_out, C_in) @ (C_in, TN) on the MXU, f32 accumulation.
        y = jnp.dot(w_ref[...], h, preferred_element_type=jnp.float32)
        if bf16_epilogue:
            # v6e/v7x: packed bf16 VALU -> cheaper bias-add + ReLU epilogue.
            return jnp.maximum(y.astype(jnp.bfloat16) + b_ref[...], 0.0)
        # v5e and older (no bf16 VALU): f32 epilogue, one downcast for next matmul.
        return jnp.maximum(y + b_ref[...], 0.0).astype(jnp.bfloat16)

    h = x_ref[0]                                   # (8,   TN) bf16, lane-dense
    h = hidden(h, w1_ref, b1_ref)                  # (64,  TN)
    h = hidden(h, w2_ref, b2_ref)                  # (64,  TN)
    h = hidden(h, w3_ref, b3_ref)                  # (64,  TN)
    h = hidden(h, w4_ref, b4_ref)                  # (128, TN)
    # Final layer: f32 epilogue, f32 store, already in (C5, points) layout.
    y = jnp.dot(w5_ref[...], h, preferred_element_type=jnp.float32)
    o_ref[0] = jnp.maximum(y + b5_ref[...], 0.0)   # (256, TN) f32


# ---------------------------------------------------------------------------
# Wrapper
# ---------------------------------------------------------------------------
def _fold_bn(W_io, b, gamma, beta, mean, var, eps=1e-5):
    """Fold eval-mode BatchNorm1d into the preceding 1x1 conv (x @ W_io + b)."""
    s = gamma / jnp.sqrt(var + eps)
    return W_io * s[None, :], (b - mean) * s + beta


def _has_bf16_valu():
    """True on chips with a packed-bf16 VPU (v6e / v7x)."""
    try:
        kind = jax.devices()[0].device_kind.lower()
    except Exception:
        return False
    return ("v6" in kind) or ("v7" in kind)


def _pick_tile_n(n, batch, t_max=2048, t_min=256, min_tiles=8):
    """Points per tile: multiple of 128, big enough to amortize the ~0.35us
    per-grid-step overhead, small enough that (a) the grid keeps >= min_tiles
    steps (v7x megacore sharding) and (b) tail-tile waste stays small."""
    t = t_max
    while t > t_min:
        tiles = pl.cdiv(n, t)
        waste = tiles * t - n
        if batch * tiles >= min_tiles and waste * 4 <= n:
            break
        t //= 2
    return min(t, max(128, pl.cdiv(n, 128) * 128))


@jax.jit
def base_pointnet_forward(x, params):
    """x: (B, N, D_IN) float32  ->  (B, 256, N) float32 (matches PyTorch output)."""
    B, N, _ = x.shape
    widths = (C1, C2, C3, C4, C5)
    bf16_epilogue = _has_bf16_valu()
    ep_dtype = jnp.bfloat16 if bf16_epilogue else jnp.float32

    # glue: fold eval-mode BN into the convs; (C_out, C_in) orientation for the
    # channels-first data layout; bf16 weights (f32 MXU accumulation in-kernel).
    # TODO(synk): real PyTorch Conv1d weights are (C_out, C_in, 1); squeeze and
    # transpose to (C_in, C_out) before _fold_bn when porting a trained checkpoint.
    ws, bs = [], []
    for i, c in enumerate(widths, start=1):
        W, b = _fold_bn(params[f"w{i}"], params[f"b{i}"], params[f"g{i}"],
                        params[f"be{i}"], params[f"rm{i}"], params[f"rv{i}"])
        W = W.T                                               # (C_out, C_in)
        if i == 1:
            W = jnp.pad(W, ((0, 0), (0, D_IN_PAD - D_IN)))    # zero cols: exact
        ws.append(W.astype(jnp.bfloat16))
        b_dtype = jnp.float32 if i == len(widths) else ep_dtype
        bs.append(b.reshape(c, 1).astype(b_dtype))

    # glue: channels-first bf16 input (B, 8, N).  The tiny transpose/pad/cast
    # pass (~24 B/point) replaces the old ~1 KiB/point output transpose.
    xt = jnp.pad(x.transpose(0, 2, 1),
                 ((0, 0), (0, D_IN_PAD - D_IN), (0, 0))).astype(jnp.bfloat16)

    TN = _pick_tile_n(N, B)
    grid = (B, pl.cdiv(N, TN))        # partial last tile along N is masked

    full = lambda arr: pl.BlockSpec(arr.shape, lambda b, i: (0, 0))
    in_specs = [pl.BlockSpec((1, D_IN_PAD, TN), lambda b, i: (b, 0, i))]
    flat_params = []
    for W, bvec in zip(ws, bs):
        in_specs += [full(W), full(bvec)]
        flat_params += [W, bvec]

    return pl.pallas_call(
        functools.partial(_pointnet_kernel, bf16_epilogue=bf16_epilogue),
        out_shape=jax.ShapeDtypeStruct((B, C5, N), jnp.float32),
        grid_spec=pltpu.PrefetchScalarGridSpec(
            num_scalar_prefetch=0,
            grid=grid,
            in_specs=in_specs,
            out_specs=pl.BlockSpec((1, C5, TN), lambda b, i: (b, 0, i)),
        ),
        compiler_params=pltpu.CompilerParams(
            dimension_semantics=("parallel", "parallel"),  # independent tiles
            vmem_limit_bytes=32 * 1024 * 1024,             # headroom on v5e
        ),
    )(xt, *flat_params)


# ---------------------------------------------------------------------------
# Pure-JAX f32 reference (unfolded conv -> BN(eval) -> ReLU, PyTorch style)
# ---------------------------------------------------------------------------
def base_pointnet_reference(x, params, eps=1e-5):
    B, N, _ = x.shape
    h = x.reshape(B * N, D_IN).astype(jnp.float32)
    for i in range(1, 6):
        h = h @ params[f"w{i}"] + params[f"b{i}"]
        h = (h - params[f"rm{i}"]) / jnp.sqrt(params[f"rv{i}"] + eps)
        h = h * params[f"g{i}"] + params[f"be{i}"]
        h = jnp.maximum(h, 0.0)
    return h.reshape(B, N, C5).transpose(0, 2, 1)


# ---------------------------------------------------------------------------
def init_params(key):
    widths = (D_IN, C1, C2, C3, C4, C5)
    keys = iter(jax.random.split(key, 5 * 6))
    params = {}
    for i in range(1, 6):
        fan_in, fan_out = widths[i - 1], widths[i]
        bound = 1.0 / math.sqrt(fan_in)
        params[f"w{i}"] = jax.random.uniform(next(keys), (fan_in, fan_out),
                                             jnp.float32, -bound, bound)
        params[f"b{i}"] = jax.random.uniform(next(keys), (fan_out,),
                                             jnp.float32, -bound, bound)
        # BatchNorm1d params / running stats (deterministic, non-trivial)
        params[f"g{i}"] = 1.0 + 0.05 * jax.random.normal(next(keys), (fan_out,), jnp.float32)
        params[f"be{i}"] = 0.02 * jax.random.normal(next(keys), (fan_out,), jnp.float32)
        params[f"rm{i}"] = 0.01 * jax.random.normal(next(keys), (fan_out,), jnp.float32)
        params[f"rv{i}"] = 1.0 + 0.1 * jax.random.uniform(next(keys), (fan_out,), jnp.float32)
    return params


if __name__ == "__main__":
    key = jax.random.PRNGKey(0)
    k_par, k_x = jax.random.split(key)

    B, N = 2, 500                       # 500 points exercises the partial-tile path
    params = init_params(k_par)
    x = jax.random.normal(k_x, (B, N, D_IN), jnp.float32)   # (batch, points, xyz)

    out = jax.block_until_ready(base_pointnet_forward(x, params))
    ref = jax.block_until_ready(base_pointnet_reference(x, params))

    assert out.shape == (B, C5, N), out.shape
    assert bool(jnp.all(jnp.isfinite(out)))
    err = float(jnp.max(jnp.abs(out - ref)) / (jnp.max(jnp.abs(ref)) + 1e-6))
    assert err < 5e-2, f"mismatch vs reference, rel err {err}"

    print("KERNEL_OK")
</pallas_src>

<mosaic_0001>
module attributes {stable_mosaic.version = 11 : i64} {
  func.func @_pointnet_kernel(%arg0: i32, %arg1: i32, %arg2: memref<1x8x256xbf16, #tpu.memory_space<vmem>>, %arg3: memref<64x8xbf16, #tpu.memory_space<vmem>>, %arg4: memref<64x1xf32, #tpu.memory_space<vmem>>, %arg5: memref<64x64xbf16, #tpu.memory_space<vmem>>, %arg6: memref<64x1xf32, #tpu.memory_space<vmem>>, %arg7: memref<64x64xbf16, #tpu.memory_space<vmem>>, %arg8: memref<64x1xf32, #tpu.memory_space<vmem>>, %arg9: memref<128x64xbf16, #tpu.memory_space<vmem>>, %arg10: memref<128x1xf32, #tpu.memory_space<vmem>>, %arg11: memref<256x128xbf16, #tpu.memory_space<vmem>>, %arg12: memref<256x1xf32, #tpu.memory_space<vmem>>, %arg13: memref<1x256x256xf32, #tpu.memory_space<vmem>>) attributes {dimension_semantics = [#tpu.dimension_semantics<parallel>, #tpu.dimension_semantics<parallel>], iteration_bounds = array<i64: 2, 2>, scalar_prefetch = 0 : i64, scratch_operands = 0 : i64, tpu.core_type = #tpu.core_type<tc>, window_params = [{transform_indices = @transform_0, window_bounds = array<i64: 1, 8, 256>}, {pipeline_mode = #tpu.pipeline_mode<synchronous>, transform_indices = @transform_1, window_bounds = array<i64: 64, 8>}, {pipeline_mode = #tpu.pipeline_mode<synchronous>, transform_indices = @transform_2, window_bounds = array<i64: 64, 1>}, {pipeline_mode = #tpu.pipeline_mode<synchronous>, transform_indices = @transform_3, window_bounds = array<i64: 64, 64>}, {pipeline_mode = #tpu.pipeline_mode<synchronous>, transform_indices = @transform_4, window_bounds = array<i64: 64, 1>}, {pipeline_mode = #tpu.pipeline_mode<synchronous>, transform_indices = @transform_5, window_bounds = array<i64: 64, 64>}, {pipeline_mode = #tpu.pipeline_mode<synchronous>, transform_indices = @transform_6, window_bounds = array<i64: 64, 1>}, {pipeline_mode = #tpu.pipeline_mode<synchronous>, transform_indices = @transform_7, window_bounds = array<i64: 128, 64>}, {pipeline_mode = #tpu.pipeline_mode<synchronous>, transform_indices = @transform_8, window_bounds = array<i64: 128, 1>}, {pipeline_mode = #tpu.pipeline_mode<synchronous>, transform_indices = @transform_9, window_bounds = array<i64: 256, 128>}, {pipeline_mode = #tpu.pipeline_mode<synchronous>, transform_indices = @transform_10, window_bounds = array<i64: 256, 1>}, {transform_indices = @transform_11, window_bounds = array<i64: 1, 256, 256>}]} {
    %c0 = arith.constant 0 : index
    %c0_0 = arith.constant 0 : index
    %c0_1 = arith.constant 0 : index
    %0 = vector.load %arg2[%c0, %c0_0, %c0_1] : memref<1x8x256xbf16, #tpu.memory_space<vmem>>, vector<1x8x256xbf16>
    %1 = vector.shape_cast %0 : vector<1x8x256xbf16> to vector<8x256xbf16>
    %c0_2 = arith.constant 0 : index
    %c0_3 = arith.constant 0 : index
    %2 = vector.load %arg3[%c0_2, %c0_3] : memref<64x8xbf16, #tpu.memory_space<vmem>>, vector<64x8xbf16>
    %cst = arith.constant dense<0.000000e+00> : vector<64x256xf32>
    %3 = tpu.matmul %2, %1, %cst {dimension_numbers = #tpu.dot_dimension_numbers<[1], [0], [0], [1], [0, 0, 1, 1], [], []>} : vector<64x8xbf16>, vector<8x256xbf16>, vector<64x256xf32> -> vector<64x256xf32>
    %c0_4 = arith.constant 0 : index
    %c0_5 = arith.constant 0 : index
    %4 = vector.load %arg4[%c0_4, %c0_5] : memref<64x1xf32, #tpu.memory_space<vmem>>, vector<64x1xf32>
    %5 = vector.broadcast %4 : vector<64x1xf32> to vector<64x256xf32>
    %6 = arith.addf %3, %5 : vector<64x256xf32>
    %cst_6 = arith.constant 0.000000e+00 : f32
    %7 = vector.broadcast %cst_6 : f32 to vector<64x256xf32>
    %8 = arith.maximumf %6, %7 : vector<64x256xf32>
    %9 = arith.truncf %8 : vector<64x256xf32> to vector<64x256xbf16>
    %c0_7 = arith.constant 0 : index
    %c0_8 = arith.constant 0 : index
    %10 = vector.load %arg5[%c0_7, %c0_8] : memref<64x64xbf16, #tpu.memory_space<vmem>>, vector<64x64xbf16>
    %cst_9 = arith.constant dense<0.000000e+00> : vector<64x256xf32>
    %11 = tpu.matmul %10, %9, %cst_9 {dimension_numbers = #tpu.dot_dimension_numbers<[1], [0], [0], [1], [0, 0, 1, 1], [], []>} : vector<64x64xbf16>, vector<64x256xbf16>, vector<64x256xf32> -> vector<64x256xf32>
    %c0_10 = arith.constant 0 : index
    %c0_11 = arith.constant 0 : index
    %12 = vector.load %arg6[%c0_10, %c0_11] : memref<64x1xf32, #tpu.memory_space<vmem>>, vector<64x1xf32>
    %13 = vector.broadcast %12 : vector<64x1xf32> to vector<64x256xf32>
    %14 = arith.addf %11, %13 : vector<64x256xf32>
    %cst_12 = arith.constant 0.000000e+00 : f32
    %15 = vector.broadcast %cst_12 : f32 to vector<64x256xf32>
    %16 = arith.maximumf %14, %15 : vector<64x256xf32>
    %17 = arith.truncf %16 : vector<64x256xf32> to vector<64x256xbf16>
    %c0_13 = arith.constant 0 : index
    %c0_14 = arith.constant 0 : index
    %18 = vector.load %arg7[%c0_13, %c0_14] : memref<64x64xbf16, #tpu.memory_space<vmem>>, vector<64x64xbf16>
    %cst_15 = arith.constant dense<0.000000e+00> : vector<64x256xf32>
    %19 = tpu.matmul %18, %17, %cst_15 {dimension_numbers = #tpu.dot_dimension_numbers<[1], [0], [0], [1], [0, 0, 1, 1], [], []>} : vector<64x64xbf16>, vector<64x256xbf16>, vector<64x256xf32> -> vector<64x256xf32>
    %c0_16 = arith.constant 0 : index
    %c0_17 = arith.constant 0 : index
    %20 = vector.load %arg8[%c0_16, %c0_17] : memref<64x1xf32, #tpu.memory_space<vmem>>, vector<64x1xf32>
    %21 = vector.broadcast %20 : vector<64x1xf32> to vector<64x256xf32>
    %22 = arith.addf %19, %21 : vector<64x256xf32>
    %cst_18 = arith.constant 0.000000e+00 : f32
    %23 = vector.broadcast %cst_18 : f32 to vector<64x256xf32>
    %24 = arith.maximumf %22, %23 : vector<64x256xf32>
    %25 = arith.truncf %24 : vector<64x256xf32> to vector<64x256xbf16>
    %c0_19 = arith.constant 0 : index
    %c0_20 = arith.constant 0 : index
    %26 = vector.load %arg9[%c0_19, %c0_20] : memref<128x64xbf16, #tpu.memory_space<vmem>>, vector<128x64xbf16>
    %cst_21 = arith.constant dense<0.000000e+00> : vector<128x256xf32>
    %27 = tpu.matmul %26, %25, %cst_21 {dimension_numbers = #tpu.dot_dimension_numbers<[1], [0], [0], [1], [0, 0, 1, 1], [], []>} : vector<128x64xbf16>, vector<64x256xbf16>, vector<128x256xf32> -> vector<128x256xf32>
    %c0_22 = arith.constant 0 : index
    %c0_23 = arith.constant 0 : index
    %28 = vector.load %arg10[%c0_22, %c0_23] : memref<128x1xf32, #tpu.memory_space<vmem>>, vector<128x1xf32>
    %29 = vector.broadcast %28 : vector<128x1xf32> to vector<128x256xf32>
    %30 = arith.addf %27, %29 : vector<128x256xf32>
    %cst_24 = arith.constant 0.000000e+00 : f32
    %31 = vector.broadcast %cst_24 : f32 to vector<128x256xf32>
    %32 = arith.maximumf %30, %31 : vector<128x256xf32>
    %33 = arith.truncf %32 : vector<128x256xf32> to vector<128x256xbf16>
    %c0_25 = arith.constant 0 : index
    %c0_26 = arith.constant 0 : index
    %34 = vector.load %arg11[%c0_25, %c0_26] : memref<256x128xbf16, #tpu.memory_space<vmem>>, vector<256x128xbf16>
    %cst_27 = arith.constant dense<0.000000e+00> : vector<256x256xf32>
    %35 = tpu.matmul %34, %33, %cst_27 {dimension_numbers = #tpu.dot_dimension_numbers<[1], [0], [0], [1], [0, 0, 1, 1], [], []>} : vector<256x128xbf16>, vector<128x256xbf16>, vector<256x256xf32> -> vector<256x256xf32>
    %c0_28 = arith.constant 0 : index
    %c0_29 = arith.constant 0 : index
    %36 = vector.load %arg12[%c0_28, %c0_29] : memref<256x1xf32, #tpu.memory_space<vmem>>, vector<256x1xf32>
    %37 = vector.broadcast %36 : vector<256x1xf32> to vector<256x256xf32>
    %38 = arith.addf %35, %37 : vector<256x256xf32>
    %cst_30 = arith.constant 0.000000e+00 : f32
    %39 = vector.broadcast %cst_30 : f32 to vector<256x256xf32>
    %40 = arith.maximumf %38, %39 : vector<256x256xf32>
    %c0_31 = arith.constant 0 : index
    %c0_32 = arith.constant 0 : index
    %c0_33 = arith.constant 0 : index
    %41 = vector.load %arg13[%c0_31, %c0_32, %c0_33] : memref<1x256x256xf32, #tpu.memory_space<vmem>>, vector<1x256x256xf32>
    %42 = vector.shape_cast %41 : vector<1x256x256xf32> to vector<256x256xf32>
    %43 = vector.shape_cast %40 : vector<256x256xf32> to vector<1x256x256xf32>
    tpu.vector_store %arg13[%c0_31, %c0_32, %c0_33], %43 {strides = array<i32>} : memref<1x256x256xf32, #tpu.memory_space<vmem>>, vector<1x256x256xf32>,
    return
  }
  func.func @transform_0(%arg0: i32, %arg1: i32) -> (i32, i32, i32) {
    %c0_i32 = arith.constant 0 : i32
    %c0_i32_0 = arith.constant 0 : i32
    return %arg0, %c0_i32, %arg1 : i32, i32, i32
  }
  func.func @transform_1(%arg0: i32, %arg1: i32) -> (i32, i32) {
    %c0_i32 = arith.constant 0 : i32
    %c0_i32_0 = arith.constant 0 : i32
    %c0_i32_1 = arith.constant 0 : i32
    return %c0_i32, %c0_i32_0 : i32, i32
  }
  func.func @transform_2(%arg0: i32, %arg1: i32) -> (i32, i32) {
    %c0_i32 = arith.constant 0 : i32
    %c0_i32_0 = arith.constant 0 : i32
    %c0_i32_1 = arith.constant 0 : i32
    return %c0_i32, %c0_i32_0 : i32, i32
  }
  func.func @transform_3(%arg0: i32, %arg1: i32) -> (i32, i32) {
    %c0_i32 = arith.constant 0 : i32
    %c0_i32_0 = arith.constant 0 : i32
    %c0_i32_1 = arith.constant 0 : i32
    return %c0_i32, %c0_i32_0 : i32, i32
  }
  func.func @transform_4(%arg0: i32, %arg1: i32) -> (i32, i32) {
    %c0_i32 = arith.constant 0 : i32
    %c0_i32_0 = arith.constant 0 : i32
    %c0_i32_1 = arith.constant 0 : i32
    return %c0_i32, %c0_i32_0 : i32, i32
  }
  func.func @transform_5(%arg0: i32, %arg1: i32) -> (i32, i32) {
    %c0_i32 = arith.constant 0 : i32
    %c0_i32_0 = arith.constant 0 : i32
    %c0_i32_1 = arith.constant 0 : i32
    return %c0_i32, %c0_i32_0 : i32, i32
  }
  func.func @transform_6(%arg0: i32, %arg1: i32) -> (i32, i32) {
    %c0_i32 = arith.constant 0 : i32
    %c0_i32_0 = arith.constant 0 : i32
    %c0_i32_1 = arith.constant 0 : i32
    return %c0_i32, %c0_i32_0 : i32, i32
  }
  func.func @transform_7(%arg0: i32, %arg1: i32) -> (i32, i32) {
    %c0_i32 = arith.constant 0 : i32
    %c0_i32_0 = arith.constant 0 : i32
    %c0_i32_1 = arith.constant 0 : i32
    return %c0_i32, %c0_i32_0 : i32, i32
  }
  func.func @transform_8(%arg0: i32, %arg1: i32) -> (i32, i32) {
    %c0_i32 = arith.constant 0 : i32
    %c0_i32_0 = arith.constant 0 : i32
    %c0_i32_1 = arith.constant 0 : i32
    return %c0_i32, %c0_i32_0 : i32, i32
  }
  func.func @transform_9(%arg0: i32, %arg1: i32) -> (i32, i32) {
    %c0_i32 = arith.constant 0 : i32
    %c0_i32_0 = arith.constant 0 : i32
    %c0_i32_1 = arith.constant 0 : i32
    return %c0_i32, %c0_i32_0 : i32, i32
  }
  func.func @transform_10(%arg0: i32, %arg1: i32) -> (i32, i32) {
    %c0_i32 = arith.constant 0 : i32
    %c0_i32_0 = arith.constant 0 : i32
    %c0_i32_1 = arith.constant 0 : i32
    return %c0_i32, %c0_i32_0 : i32, i32
  }
  func.func @transform_11(%arg0: i32, %arg1: i32) -> (i32, i32, i32) {
    %c0_i32 = arith.constant 0 : i32
    %c0_i32_0 = arith.constant 0 : i32
    return %arg0, %c0_i32, %arg1 : i32, i32, i32
  }
}

</mosaic_0001>

<llo_original>
// kernel: base_pointnet_forward.1
$region0: #{base_pointnet_forward.1}
  #allocation0 [shape = 'u32[]', space=smem, size = 0x4, offset = 0x4, fixed_abs, tag = 'smem constant byte address 0x4 - core index']
  #allocation1 [shape = 'u32[72,128]{1,0:T(1,128)}', space=vmem, size = 0x9000, scoped, tag = 'internal scratch']
  %s0 = inlined_call_operand.vmem [shape: bf16[2,8,500], index: 0, kind: input, shape index: {}]
  %s1 = inlined_call_operand.vmem [shape: bf16[64,8], index: 1, kind: input, shape index: {}]
  %s2 = inlined_call_operand.vmem [shape: f32[64,1], index: 2, kind: input, shape index: {}]
  %s3 = inlined_call_operand.vmem [shape: bf16[64,64], index: 3, kind: input, shape index: {}]
  %s4 = inlined_call_operand.vmem [shape: f32[64,1], index: 4, kind: input, shape index: {}]
  %s5 = inlined_call_operand.vmem [shape: bf16[64,64], index: 5, kind: input, shape index: {}]
  %s6 = inlined_call_operand.vmem [shape: f32[64,1], index: 6, kind: input, shape index: {}]
  %s7 = inlined_call_operand.vmem [shape: bf16[128,64], index: 7, kind: input, shape index: {}]
  %s8 = inlined_call_operand.vmem [shape: f32[128,1], index: 8, kind: input, shape index: {}]
  %s9 = inlined_call_operand.vmem [shape: bf16[256,128], index: 9, kind: input, shape index: {}]
  %s10 = inlined_call_operand.vmem [shape: f32[256,1], index: 10, kind: input, shape index: {}]
  %s11 = inlined_call_operand.vmem [shape: f32[2,256,500], index: 11, kind: output, shape index: {}]
  %s12 = sld [smem:[#allocation0]]
  $region96: #{base_pointnet_forward.1} parent=0
    _
  %s14 = ssub.s32 1, %s12
  %s15 = scalar_select 0, %s14, %s12
  $region1: #{base_pointnet_forward.1} parent=0
    #allocation2 [shape = 'u8[524288]{0}', space=vmem, size = 0x80000, scoped, tag = 'output window, operand 0']
    loop: start=0, step=1, limit=6
    $region2: #{base_pointnet_forward.1} parent=1 // loop_pre_header
      _
    $region3: #{base_pointnet_forward.1} parent=1 // loop_header
      %s17 = sphi 0, %s21
      %p18 = scmp.ge.s32.totalorder %s17, 6
      %s24 = sphi 0, %s36
      %s25 = sphi 0, %s32
      %s26 = sphi 0, %s24
      %s27 = sphi 0, %s25
      %s28 = sphi 0, %s26
      %s29 = sphi 0, %s27
      %s41 = sphi 0, %s43
      %s44 = sphi 0, %s41
      %s45 = sphi 0, %s44
      %s61 = sphi 0, %s45
      %s65 = sphi 0, %s65
      %s67 = sphi 0, %s65
      %s68 = sphi 0, %s67
      %s82 = sphi 0, %s68
      %s86 = sphi 0, %s86
      %s88 = sphi 0, %s86
      %s89 = sphi 0, %s88
      %s103 = sphi 0, %s89
      %s107 = sphi 0, %s107
      %s109 = sphi 0, %s107
      %s110 = sphi 0, %s109
      %s124 = sphi 0, %s110
      %s128 = sphi 0, %s128
      %s130 = sphi 0, %s128
      %s131 = sphi 0, %s130
      %s145 = sphi 0, %s131
      %s149 = sphi 0, %s149
      %s151 = sphi 0, %s149
      %s152 = sphi 0, %s151
      %s166 = sphi 0, %s152
      %s170 = sphi 0, %s170
      %s172 = sphi 0, %s170
      %s173 = sphi 0, %s172
      %s187 = sphi 0, %s173
      %s191 = sphi 0, %s191
      %s193 = sphi 0, %s191
      %s194 = sphi 0, %s193
      %s208 = sphi 0, %s194
      %s212 = sphi 0, %s212
      %s214 = sphi 0, %s212
      %s215 = sphi 0, %s214
      %s229 = sphi 0, %s215
      %s233 = sphi 0, %s233
      %s235 = sphi 0, %s233
      %s236 = sphi 0, %s235
      %s250 = sphi 0, %s236
      %s254 = sphi 0, %s254
      %s256 = sphi 0, %s254
      %s257 = sphi 0, %s256
      %s271 = sphi 0, %s257
      %s279 = sphi 0, %s281
      %s282 = sphi 0, %s279
      %s283 = sphi 0, %s282
      %s299 = sphi 0, %s283
    $region4: #{base_pointnet_forward.1} parent=1 // loop_header_branch
      %20 = sbr.rel (%p18) target = $region8
    $region5: #{base_pointnet_forward.1} parent=1 // loop_body
      %s22 = ssub.s32 %s17, 1
      %s23 = ssub.s32 %s17, 2
      %s30 = sadd.s32 1, %s25
      %p31 = scmp.ge.s32.totalorder %s30, 2
      %s32 = scalar_select %p31, 0, %s30
      %s33 = sadd.s32 1, %s24
      %s34 = scalar_select %p31, %s33, %s24
      %p35 = scmp.ge.s32.totalorder %s34, 2
      %s36 = scalar_select %p35, 0, %s34
      %s37 = ssub.s32 %s24, %s36
      %s38 = ssub.s32 %s25, %s32
      %s39 = sor.u32 %s37, %s38
      %p40 = scmp.eq.s32.totalorder %s39, 0
      %s42 = sadd.s32 %s41, 1
      %s43 = scalar_select %p40, %s41, %s42
      %p46 = pneg %p40
      %p47 = scmp.eq.s32.totalorder %s17, 3
      %p48 = por %p46, %p47
      %p49 = scmp.ne.s32.totalorder %s41, %s44
      %p50 = scmp.eq.s32.totalorder %s17, 0
      %p51 = por %p49, %p50
      %p52 = scmp.ne.s32.totalorder %s41, %s44
      %p53 = scmp.eq.s32.totalorder %s22, 3
      %p54 = por %p52, %p53
      %p55 = scmp.ne.s32.totalorder %s44, %s45
      %p56 = scmp.eq.s32.totalorder %s22, 0
      %p57 = por %p55, %p56
      %p58 = scmp.ne.s32.totalorder %s44, %s45
      %p59 = scmp.eq.s32.totalorder %s23, 3
      %p60 = por %p58, %p59
      %p62 = scmp.ne.s32.totalorder %s45, %s61
      %p63 = scmp.eq.s32.totalorder %s23, 0
      %p64 = por %p62, %p63
      %s66 = sadd.s32 %s65, 1
      %p69 = scmp.eq.s32.totalorder %s17, 3
      %p70 = scmp.ne.s32.totalorder %s65, %s67
      %p71 = scmp.eq.s32.totalorder %s17, 0
      %p72 = por %p70, %p71
      %p73 = scmp.ne.s32.totalorder %s65, %s67
      %p74 = scmp.eq.s32.totalorder %s22, 3
      %p75 = por %p73, %p74
      %p76 = scmp.ne.s32.totalorder %s67, %s68
      %p77 = scmp.eq.s32.totalorder %s22, 0
      %p78 = por %p76, %p77
      %p79 = scmp.ne.s32.totalorder %s67, %s68
      %p80 = scmp.eq.s32.totalorder %s23, 3
      %p81 = por %p79, %p80
      %p83 = scmp.ne.s32.totalorder %s68, %s82
      %p84 = scmp.eq.s32.totalorder %s23, 0
      %p85 = por %p83, %p84
      %s87 = sadd.s32 %s86, 1
      %p90 = scmp.eq.s32.totalorder %s17, 3
      %p91 = scmp.ne.s32.totalorder %s86, %s88
      %p92 = scmp.eq.s32.totalorder %s17, 0
      %p93 = por %p91, %p92
      %p94 = scmp.ne.s32.totalorder %s86, %s88
      %p95 = scmp.eq.s32.totalorder %s22, 3
      %p96 = por %p94, %p95
      %p97 = scmp.ne.s32.totalorder %s88, %s89
      %p98 = scmp.eq.s32.totalorder %s22, 0
      %p99 = por %p97, %p98
      %p100 = scmp.ne.s32.totalorder %s88, %s89
      %p101 = scmp.eq.s32.totalorder %s23, 3
      %p102 = por %p100, %p101
      %p104 = scmp.ne.s32.totalorder %s89, %s103
      %p105 = scmp.eq.s32.totalorder %s23, 0
      %p106 = por %p104, %p105
      %s108 = sadd.s32 %s107, 1
      %p111 = scmp.eq.s32.totalorder %s17, 3
      %p112 = scmp.ne.s32.totalorder %s107, %s109
      %p113 = scmp.eq.s32.totalorder %s17, 0
      %p114 = por %p112, %p113
      %p115 = scmp.ne.s32.totalorder %s107, %s109
      %p116 = scmp.eq.s32.totalorder %s22, 3
      %p117 = por %p115, %p116
      %p118 = scmp.ne.s32.totalorder %s109, %s110
      %p119 = scmp.eq.s32.totalorder %s22, 0
      %p120 = por %p118, %p119
      %p121 = scmp.ne.s32.totalorder %s109, %s110
      %p122 = scmp.eq.s32.totalorder %s23, 3
      %p123 = por %p121, %p122
      %p125 = scmp.ne.s32.totalorder %s110, %s124
      %p126 = scmp.eq.s32.totalorder %s23, 0
      %p127 = por %p125, %p126
      %s129 = sadd.s32 %s128, 1
      %p132 = scmp.eq.s32.totalorder %s17, 3
      %p133 = scmp.ne.s32.totalorder %s128, %s130
      %p134 = scmp.eq.s32.totalorder %s17, 0
      %p135 = por %p133, %p134
      %p136 = scmp.ne.s32.totalorder %s128, %s130
      %p137 = scmp.eq.s32.totalorder %s22, 3
      %p138 = por %p136, %p137
      %p139 = scmp.ne.s32.totalorder %s130, %s131
      %p140 = scmp.eq.s32.totalorder %s22, 0
      %p141 = por %p139, %p140
      %p142 = scmp.ne.s32.totalorder %s130, %s131
      %p143 = scmp.eq.s32.totalorder %s23, 3
      %p144 = por %p142, %p143
      %p146 = scmp.ne.s32.totalorder %s131, %s145
      %p147 = scmp.eq.s32.totalorder %s23, 0
      %p148 = por %p146, %p147
      %s150 = sadd.s32 %s149, 1
      %p153 = scmp.eq.s32.totalorder %s17, 3
      %p154 = scmp.ne.s32.totalorder %s149, %s151
      %p155 = scmp.eq.s32.totalorder %s17, 0
      %p156 = por %p154, %p155
      %p157 = scmp.ne.s32.totalorder %s149, %s151
      %p158 = scmp.eq.s32.totalorder %s22, 3
      %p159 = por %p157, %p158
      %p160 = scmp.ne.s32.totalorder %s151, %s152
      %p161 = scmp.eq.s32.totalorder %s22, 0
      %p162 = por %p160, %p161
      %p163 = scmp.ne.s32.totalorder %s151, %s152
      %p164 = scmp.eq.s32.totalorder %s23, 3
      %p165 = por %p163, %p164
      %p167 = scmp.ne.s32.totalorder %s152, %s166
      %p168 = scmp.eq.s32.totalorder %s23, 0
      %p169 = por %p167, %p168
      %s171 = sadd.s32 %s170, 1
      %p174 = scmp.eq.s32.totalorder %s17, 3
      %p175 = scmp.ne.s32.totalorder %s170, %s172
      %p176 = scmp.eq.s32.totalorder %s17, 0
      %p177 = por %p175, %p176
      %p178 = scmp.ne.s32.totalorder %s170, %s172
      %p179 = scmp.eq.s32.totalorder %s22, 3
      %p180 = por %p178, %p179
      %p181 = scmp.ne.s32.totalorder %s172, %s173
      %p182 = scmp.eq.s32.totalorder %s22, 0
      %p183 = por %p181, %p182
      %p184 = scmp.ne.s32.totalorder %s172, %s173
      %p185 = scmp.eq.s32.totalorder %s23, 3
      %p186 = por %p184, %p185
      %p188 = scmp.ne.s32.totalorder %s173, %s187
      %p189 = scmp.eq.s32.totalorder %s23, 0
      %p190 = por %p188, %p189
      %s192 = sadd.s32 %s191, 1
      %p195 = scmp.eq.s32.totalorder %s17, 3
      %p196 = scmp.ne.s32.totalorder %s191, %s193
      %p197 = scmp.eq.s32.totalorder %s17, 0
      %p198 = por %p196, %p197
      %p199 = scmp.ne.s32.totalorder %s191, %s193
      %p200 = scmp.eq.s32.totalorder %s22, 3
      %p201 = por %p199, %p200
      %p202 = scmp.ne.s32.totalorder %s193, %s194
      %p203 = scmp.eq.s32.totalorder %s22, 0
      %p204 = por %p202, %p203
      %p205 = scmp.ne.s32.totalorder %s193, %s194
      %p206 = scmp.eq.s32.totalorder %s23, 3
      %p207 = por %p205, %p206
      %p209 = scmp.ne.s32.totalorder %s194, %s208
      %p210 = scmp.eq.s32.totalorder %s23, 0
      %p211 = por %p209, %p210
      %s213 = sadd.s32 %s212, 1
      %p216 = scmp.eq.s32.totalorder %s17, 3
      %p217 = scmp.ne.s32.totalorder %s212, %s214
      %p218 = scmp.eq.s32.totalorder %s17, 0
      %p219 = por %p217, %p218
      %p220 = scmp.ne.s32.totalorder %s212, %s214
      %p221 = scmp.eq.s32.totalorder %s22, 3
      %p222 = por %p220, %p221
      %p223 = scmp.ne.s32.totalorder %s214, %s215
      %p224 = scmp.eq.s32.totalorder %s22, 0
      %p225 = por %p223, %p224
      %p226 = scmp.ne.s32.totalorder %s214, %s215
      %p227 = scmp.eq.s32.totalorder %s23, 3
      %p228 = por %p226, %p227
      %p230 = scmp.ne.s32.totalorder %s215, %s229
      %p231 = scmp.eq.s32.totalorder %s23, 0
      %p232 = por %p230, %p231
      %s234 = sadd.s32 %s233, 1
      %p237 = scmp.eq.s32.totalorder %s17, 3
      %p238 = scmp.ne.s32.totalorder %s233, %s235
      %p239 = scmp.eq.s32.totalorder %s17, 0
      %p240 = por %p238, %p239
      %p241 = scmp.ne.s32.totalorder %s233, %s235
      %p242 = scmp.eq.s32.totalorder %s22, 3
      %p243 = por %p241, %p242
      %p244 = scmp.ne.s32.totalorder %s235, %s236
      %p245 = scmp.eq.s32.totalorder %s22, 0
      %p246 = por %p244, %p245
      %p247 = scmp.ne.s32.totalorder %s235, %s236
      %p248 = scmp.eq.s32.totalorder %s23, 3
      %p249 = por %p247, %p248
      %p251 = scmp.ne.s32.totalorder %s236, %s250
      %p252 = scmp.eq.s32.totalorder %s23, 0
      %p253 = por %p251, %p252
      %s255 = sadd.s32 %s254, 1
      %p258 = scmp.eq.s32.totalorder %s17, 3
      %p259 = scmp.ne.s32.totalorder %s254, %s256
      %p260 = scmp.eq.s32.totalorder %s17, 0
      %p261 = por %p259, %p260
      %p262 = scmp.ne.s32.totalorder %s254, %s256
      %p263 = scmp.eq.s32.totalorder %s22, 3
      %p264 = por %p262, %p263
      %p265 = scmp.ne.s32.totalorder %s256, %s257
      %p266 = scmp.eq.s32.totalorder %s22, 0
      %p267 = por %p265, %p266
      %p268 = scmp.ne.s32.totalorder %s256, %s257
      %p269 = scmp.eq.s32.totalorder %s23, 3
      %p270 = por %p268, %p269
      %p272 = scmp.ne.s32.totalorder %s257, %s271
      %p273 = scmp.eq.s32.totalorder %s23, 0
      %p274 = por %p272, %p273
      %s275 = ssub.s32 %s24, %s36
      %s276 = ssub.s32 %s25, %s32
      %s277 = sor.u32 %s275, %s276
      %p278 = scmp.eq.s32.totalorder %s277, 0
      %s280 = sadd.s32 %s279, 1
      %s281 = scalar_select %p278, %s279, %s280
      %p284 = pneg %p278
      %p285 = scmp.eq.s32.totalorder %s17, 3
      %p286 = por %p284, %p285
      %p287 = scmp.ne.s32.totalorder %s279, %s282
      %p288 = scmp.eq.s32.totalorder %s17, 0
      %p289 = por %p287, %p288
      %p290 = scmp.ne.s32.totalorder %s279, %s282
      %p291 = scmp.eq.s32.totalorder %s22, 3
      %p292 = por %p290, %p291
      %p293 = scmp.ne.s32.totalorder %s282, %s283
      %p294 = scmp.eq.s32.totalorder %s22, 0
      %p295 = por %p293, %p294
      %p296 = scmp.ne.s32.totalorder %s282, %s283
      %p297 = scmp.eq.s32.totalorder %s23, 3
      %p298 = por %p296, %p297
      %p300 = scmp.ne.s32.totalorder %s283, %s299
      %p301 = scmp.eq.s32.totalorder %s23, 0
      %p302 = por %p300, %p301
      %p303 = scmp.le.s32.totalorder 1, %s17
      %p304 = scmp.lt.s32.totalorder %s17, 5
      %p305 = pnand %p303, %p304
      %p306 = pneg %p305
      // Predicated region
      $region9: #{base_pointnet_forward.1} parent=5 // pred_check
        _
      $region10: #{base_pointnet_forward.1} parent=5 // pred_check_branch
        %308 = sbr.rel (%p305) target = $region12
      $region11: #{base_pointnet_forward.1} parent=5 // pred_region
        %s309 = ssub.s32 %s17, 1
        // Predicated region
        $region13: #{base_pointnet_forward.1} parent=11 // pred_check
          %p310 = pneg %p78
        $region14: #{base_pointnet_forward.1} parent=11 // pred_check_branch
          %312 = sbr.rel (%p310) target = $region16
        $region15: #{base_pointnet_forward.1} parent=11 // pred_region
          _
        $region16: #{base_pointnet_forward.1} parent=11 // pred_fallthru
          _
        // Predicated region
        $region17: #{base_pointnet_forward.1} parent=11 // pred_check
          %p313 = pneg %p99
        $region18: #{base_pointnet_forward.1} parent=11 // pred_check_branch
          %315 = sbr.rel (%p313) target = $region20
        $region19: #{base_pointnet_forward.1} parent=11 // pred_region
          _
        $region20: #{base_pointnet_forward.1} parent=11 // pred_fallthru
          _
        // Predicated region
        $region21: #{base_pointnet_forward.1} parent=11 // pred_check
          %p316 = pneg %p120
        $region22: #{base_pointnet_forward.1} parent=11 // pred_check_branch
          %318 = sbr.rel (%p316) target = $region24
        $region23: #{base_pointnet_forward.1} parent=11 // pred_region
          _
        $region24: #{base_pointnet_forward.1} parent=11 // pred_fallthru
          _
        // Predicated region
        $region25: #{base_pointnet_forward.1} parent=11 // pred_check
          %p319 = pneg %p141
        $region26: #{base_pointnet_forward.1} parent=11 // pred_check_branch
          %321 = sbr.rel (%p319) target = $region28
        $region27: #{base_pointnet_forward.1} parent=11 // pred_region
          _
        $region28: #{base_pointnet_forward.1} parent=11 // pred_fallthru
          _
        // Predicated region
        $region29: #{base_pointnet_forward.1} parent=11 // pred_check
          %p322 = pneg %p162
        $region30: #{base_pointnet_forward.1} parent=11 // pred_check_branch
          %324 = sbr.rel (%p322) target = $region32
        $region31: #{base_pointnet_forward.1} parent=11 // pred_region
          _
        $region32: #{base_pointnet_forward.1} parent=11 // pred_fallthru
          _
        // Predicated region
        $region33: #{base_pointnet_forward.1} parent=11 // pred_check
          %p325 = pneg %p183
        $region34: #{base_pointnet_forward.1} parent=11 // pred_check_branch
          %327 = sbr.rel (%p325) target = $region36
        $region35: #{base_pointnet_forward.1} parent=11 // pred_region
          _
        $region36: #{base_pointnet_forward.1} parent=11 // pred_fallthru
          _
        // Predicated region
        $region37: #{base_pointnet_forward.1} parent=11 // pred_check
          %p328 = pneg %p204
        $region38: #{base_pointnet_forward.1} parent=11 // pred_check_branch
          %330 = sbr.rel (%p328) target = $region40
        $region39: #{base_pointnet_forward.1} parent=11 // pred_region
          _
        $region40: #{base_pointnet_forward.1} parent=11 // pred_fallthru
          _
        // Predicated region
        $region41: #{base_pointnet_forward.1} parent=11 // pred_check
          %p331 = pneg %p225
        $region42: #{base_pointnet_forward.1} parent=11 // pred_check_branch
          %333 = sbr.rel (%p331) target = $region44
        $region43: #{base_pointnet_forward.1} parent=11 // pred_region
          _
        $region44: #{base_pointnet_forward.1} parent=11 // pred_fallthru
          _
        // Predicated region
        $region45: #{base_pointnet_forward.1} parent=11 // pred_check
          %p334 = pneg %p246
        $region46: #{base_pointnet_forward.1} parent=11 // pred_check_branch
          %336 = sbr.rel (%p334) target = $region48
        $region47: #{base_pointnet_forward.1} parent=11 // pred_region
          _
        $region48: #{base_pointnet_forward.1} parent=11 // pred_fallthru
          _
        // Predicated region
        $region49: #{base_pointnet_forward.1} parent=11 // pred_check
          %p337 = pneg %p267
        $region50: #{base_pointnet_forward.1} parent=11 // pred_check_branch
          %339 = sbr.rel (%p337) target = $region52
        $region51: #{base_pointnet_forward.1} parent=11 // pred_region
          _
        $region52: #{base_pointnet_forward.1} parent=11 // pred_fallthru
          _
      $region12: #{base_pointnet_forward.1} parent=5 // pred_fallthru
        _
      %p340 = scmp.lt.s32.totalorder %s17, 4
      // Predicated region
      $region53: #{base_pointnet_forward.1} parent=5 // pred_check
        %p341 = pneg %p340
      $region54: #{base_pointnet_forward.1} parent=5 // pred_check_branch
        %343 = sbr.rel (%p341) target = $region56
      $region55: #{base_pointnet_forward.1} parent=5 // pred_region
        // Predicated region
        $region57: #{base_pointnet_forward.1} parent=55 // pred_check
          %p344 = pneg %p51
        $region58: #{base_pointnet_forward.1} parent=55 // pred_check_branch
          %346 = sbr.rel (%p344) target = $region60
        $region59: #{base_pointnet_forward.1} parent=55 // pred_region
          %s347 = smul.u32 2, %s25
          %p348 = scmp.lt.s32.totalorder %s24, 1
          %s349 = scalar_select %p348, %s24, 1
          %p350 = scmp.lt.s32.totalorder %s347, 3
          %s351 = scalar_select %p350, %s347, 3
          %s352 = smul.addr %s349, 4
          %s353 = sadd.s32 %s351, %s352
          %s354 = smul.addr %s353, 4
          %s355 = scalar_lea.vmem %s0, %s354
          %s356 = smul.u32 2, %s25
        $region60: #{base_pointnet_forward.1} parent=55 // pred_fallthru
          _
      $region56: #{base_pointnet_forward.1} parent=5 // pred_fallthru
        _
      %p357 = scmp.le.s32.totalorder 1, %s17
      %p358 = scmp.lt.s32.totalorder %s17, 5
      %p359 = pnand %p357, %p358
      %p360 = pneg %p359
      // Predicated region
      $region61: #{base_pointnet_forward.1} parent=5 // pred_check
        _
      $region62: #{base_pointnet_forward.1} parent=5 // pred_check_branch
        %362 = sbr.rel (%p359) target = $region64
      $region63: #{base_pointnet_forward.1} parent=5 // pred_region
        %s363 = ssub.s32 %s17, 1
        %s364 = smul.u32 2, %s27
        %p365 = scmp.lt.s32.totalorder %s26, 1
        %s366 = scalar_select %p365, %s26, 1
        %p367 = scmp.lt.s32.totalorder %s364, 3
        %s368 = scalar_select %p367, %s364, 3
        %s369 = smul.addr %s366, 4
        %s370 = sadd.s32 %s368, %s369
        %s371 = smul.addr %s370, 4
        %s372 = scalar_lea.vmem %s0, %s371
        %p373 = pneg %p57
        %p374 = pneg %p54
        %p375 = pneg %p78
        %p376 = pneg %p75
        %p377 = pneg %p99
        %p378 = pneg %p96
        %p379 = pneg %p120
        %p380 = pneg %p117
        %p381 = pneg %p141
        %p382 = pneg %p138
        %p383 = pneg %p162
        %p384 = pneg %p159
        %p385 = pneg %p183
        %p386 = pneg %p180
        %p387 = pneg %p204
        %p388 = pneg %p201
        %p389 = pneg %p225
        %p390 = pneg %p222
        %p391 = pneg %p246
        %p392 = pneg %p243
        %p393 = pneg %p267
        %p394 = pneg %p264
        %p395 = pneg %p295
        %p396 = pneg %p292
        %s397 = sand.u32 %s282, 1
        %s398 = sand.u32 %s282, 1
        %s399 = smul.addr %s398, 512
        %s400 = scalar_lea.vmem [#allocation2], %s399
        %s401 = smul.u32 2, %s27
        %p402 = scmp.lt.s32.totalorder %s26, 1
        %s403 = scalar_select %p402, %s26, 1
        %p404 = scmp.lt.s32.totalorder %s401, 3
        %s405 = scalar_select %p404, %s401, 3
        %s406 = smul.addr %s403, 4
        %s407 = sadd.s32 %s405, %s406
        %s408 = smul.addr %s407, 4
        %s409 = scalar_lea.vmem %s0, %s408
        %s410 = smul.u32 2, %s27
        %s411 = smul.u32 2, %s27
        %v413 = vld [vmem:[%s409] sm:$0xff]
        %v414 = vld [vmem:[%s1] sm:$0xf]
        %v415 = vld [vmem:[%s1 + $0x4] sm:$0xf]
        %v416 = vld [vmem:[%s1 + $0x8] sm:$0xf]
        %v417 = vld [vmem:[%s1 + $0xc] sm:$0xf]
        %v418 = vld [vmem:[%s1 + $0x10] sm:$0xf]
        %v419 = vld [vmem:[%s1 + $0x14] sm:$0xf]
        %v420 = vld [vmem:[%s1 + $0x18] sm:$0xf]
        %v421 = vld [vmem:[%s1 + $0x1c] sm:$0xf]
        %v422 = vld [vmem:[%s2] sm:$0xff]
        %v423 = vld [vmem:[%s2 + $0x8] sm:$0xff]
        %v424 = vld [vmem:[%s2 + $0x10] sm:$0xff]
        %v425 = vld [vmem:[%s2 + $0x18] sm:$0xff]
        %v426 = vld [vmem:[%s2 + $0x20] sm:$0xff]
        %v427 = vld [vmem:[%s2 + $0x28] sm:$0xff]
        %v428 = vld [vmem:[%s2 + $0x30] sm:$0xff]
        %v429 = vld [vmem:[%s2 + $0x38] sm:$0xff]
        %431 = vset.pattern.permute.xlu0 0
        %432 = vperm.xlu0 %431, %v422
        %v433 = vpop.permute.xlu0 %432
        %436 = vset.pattern.permute.xlu0 0
        %437 = vperm.xlu0 %436, %v423
        %v438 = vpop.permute.xlu0 %437
        %441 = vset.pattern.permute.xlu0 0
        %442 = vperm.xlu0 %441, %v424
        %v443 = vpop.permute.xlu0 %442
        %446 = vset.pattern.permute.xlu0 0
        %447 = vperm.xlu0 %446, %v425
        %v448 = vpop.permute.xlu0 %447
        %451 = vset.pattern.permute.xlu0 0
        %452 = vperm.xlu0 %451, %v426
        %v453 = vpop.permute.xlu0 %452
        %456 = vset.pattern.permute.xlu0 0
        %457 = vperm.xlu0 %456, %v427
        %v458 = vpop.permute.xlu0 %457
        %461 = vset.pattern.permute.xlu0 0
        %462 = vperm.xlu0 %461, %v428
        %v463 = vpop.permute.xlu0 %462
        %466 = vset.pattern.permute.xlu0 0
        %467 = vperm.xlu0 %466, %v429
        %v468 = vpop.permute.xlu0 %467
        %v478 = vunpack.c.l.b16 %v414
        %v479 = vunpack.c.l.b16 %v415
        %v480 = vunpack.c.l.b16 %v416
        %v481 = vunpack.c.l.b16 %v417
        %v482 = vunpack.c.l.b16 %v418
        %v483 = vunpack.c.l.b16 %v419
        %v484 = vunpack.c.l.b16 %v420
        %v485 = vunpack.c.l.b16 %v421
        %v486 = vpack.c.b16 %v479, %v478
        %v487 = vpack.c.b16 %v481, %v480
        %v488 = vpack.c.b16 %v483, %v482
        %v489 = vpack.c.b16 %v485, %v484
        %v491 = vunpack.c.l.b16 %v413
        %v492 = vunpack.c.h.b16 %v413
        %v493 = vpack.c.b16 %v491, %v491
        %v494 = vpack.c.b16 %v492, %v492
        %vm495 = vcmask 64512
        %v497 = vsel %vm495, %v486, 0
        %v500 = vsel %vm495, %v487, 0
        %v503 = vsel %vm495, %v488, 0
        %v506 = vsel %vm495, %v489, 0
        %vm508 = vcmask 1043456
        %v510 = vsel %vm508, %v493, 0
        %v513 = vsel %vm508, %v494, 0
        %515 = vmatpush.bf16.msra.mxu0 0
        %516 = vmatpush.bf16.msra.mxu0 0
        %517 = vmatpush.bf16.msra.mxu0 0
        %518 = vmatpush.bf16.msra.mxu0 0
        %519 = vmatpush.bf16.msra.mxu0 0
        %520 = vmatpush.bf16.msra.mxu0 0
        %521 = vmatpush.bf16.msra.mxu0 0
        %522 = vmatpush.bf16.msra.mxu0 %v510
        %523 = vmatmul.bf16.gmra.mxu0 %v497
        %v524 = vpop.f32.mrf.mxu0
        %v525 = vadd.f32 %v433, %v524
        %v526 = vpop.f32.mrf.mxu0
        %v527 = vadd.f32 %v438, %v526
        %528 = vmatmul.bf16.gmra.mxu0 %v500
        %v529 = vpop.f32.mrf.mxu0
        %v530 = vadd.f32 %v443, %v529
        %v531 = vpop.f32.mrf.mxu0
        %v532 = vadd.f32 %v448, %v531
        %533 = vmatmul.bf16.gmra.mxu0 %v503
        %v534 = vpop.f32.mrf.mxu0
        %v535 = vadd.f32 %v453, %v534
        %v536 = vpop.f32.mrf.mxu0
        %v537 = vadd.f32 %v458, %v536
        %538 = vmatmul.bf16.gmra.mxu0 %v506
        %v539 = vpop.f32.mrf.mxu0
        %v540 = vadd.f32 %v463, %v539
        %v541 = vpop.f32.mrf.mxu0
        %v542 = vadd.f32 %v468, %v541
        %543 = vdwg.mxu0
        %544 = vmatpush.bf16.msra.mxu0 0
        %545 = vmatpush.bf16.msra.mxu0 0
        %546 = vmatpush.bf16.msra.mxu0 0
        %547 = vmatpush.bf16.msra.mxu0 0
        %548 = vmatpush.bf16.msra.mxu0 0
        %549 = vmatpush.bf16.msra.mxu0 0
        %550 = vmatpush.bf16.msra.mxu0 0
        %551 = vmatpush.bf16.msra.mxu0 %v513
        %552 = vmatmul.bf16.gmra.mxu0 %v497
        %v553 = vpop.f32.mrf.mxu0
        %v554 = vadd.f32 %v433, %v553
        %v555 = vpop.f32.mrf.mxu0
        %v556 = vadd.f32 %v438, %v555
        %557 = vmatmul.bf16.gmra.mxu0 %v500
        %v558 = vpop.f32.mrf.mxu0
        %v559 = vadd.f32 %v443, %v558
        %v560 = vpop.f32.mrf.mxu0
        %v561 = vadd.f32 %v448, %v560
        %562 = vmatmul.bf16.gmra.mxu0 %v503
        %v563 = vpop.f32.mrf.mxu0
        %v564 = vadd.f32 %v453, %v563
        %v565 = vpop.f32.mrf.mxu0
        %v566 = vadd.f32 %v458, %v565
        %567 = vmatmul.bf16.gmra.mxu0 %v506
        %v568 = vpop.f32.mrf.mxu0
        %v569 = vadd.f32 %v463, %v568
        %v570 = vpop.f32.mrf.mxu0
        %v571 = vadd.f32 %v468, %v570
        %572 = vdwg.mxu0
        %v573 = vmax.f32 %v525, 0.0
        %v574 = vmax.f32 %v554, 0.0
        %v575 = vmax.f32 %v527, 0.0
        %v576 = vmax.f32 %v556, 0.0
        %v577 = vmax.f32 %v530, 0.0
        %v578 = vmax.f32 %v559, 0.0
        %v579 = vmax.f32 %v532, 0.0
        %v580 = vmax.f32 %v561, 0.0
        %v581 = vmax.f32 %v535, 0.0
        %v582 = vmax.f32 %v564, 0.0
        %v583 = vmax.f32 %v537, 0.0
        %v584 = vmax.f32 %v566, 0.0
        %v585 = vmax.f32 %v540, 0.0
        %v586 = vmax.f32 %v569, 0.0
        %v587 = vmax.f32 %v542, 0.0
        %v588 = vmax.f32 %v571, 0.0
        %v589 = vpack.c.bf16 %v575, %v573
        %v590 = vpack.c.bf16 %v576, %v574
        %v591 = vpack.c.bf16 %v579, %v577
        %v592 = vpack.c.bf16 %v580, %v578
        %v593 = vpack.c.bf16 %v583, %v581
        %v594 = vpack.c.bf16 %v584, %v582
        %v595 = vpack.c.bf16 %v587, %v585
        %v596 = vpack.c.bf16 %v588, %v586
        %v597 = vld [vmem:[%s3] sm:$0xf]
        %v598 = vld [vmem:[%s3 + $0x4] sm:$0xf]
        %v599 = vld [vmem:[%s3 + $0x8] sm:$0xf]
        %v600 = vld [vmem:[%s3 + $0xc] sm:$0xf]
        %v601 = vld [vmem:[%s3 + $0x10] sm:$0xf]
        %v602 = vld [vmem:[%s3 + $0x14] sm:$0xf]
        %v603 = vld [vmem:[%s3 + $0x18] sm:$0xf]
        %v604 = vld [vmem:[%s3 + $0x1c] sm:$0xf]
        %v605 = vld [vmem:[%s4] sm:$0xff]
        %v606 = vld [vmem:[%s4 + $0x8] sm:$0xff]
        %v607 = vld [vmem:[%s4 + $0x10] sm:$0xff]
        %v608 = vld [vmem:[%s4 + $0x18] sm:$0xff]
        %v609 = vld [vmem:[%s4 + $0x20] sm:$0xff]
        %v610 = vld [vmem:[%s4 + $0x28] sm:$0xff]
        %v611 = vld [vmem:[%s4 + $0x30] sm:$0xff]
        %v612 = vld [vmem:[%s4 + $0x38] sm:$0xff]
        %614 = vset.pattern.permute.xlu0 0
        %615 = vperm.xlu0 %614, %v605
        %v616 = vpop.permute.xlu0 %615
        %619 = vset.pattern.permute.xlu0 0
        %620 = vperm.xlu0 %619, %v606
        %v621 = vpop.permute.xlu0 %620
        %624 = vset.pattern.permute.xlu0 0
        %625 = vperm.xlu0 %624, %v607
        %v626 = vpop.permute.xlu0 %625
        %629 = vset.pattern.permute.xlu0 0
        %630 = vperm.xlu0 %629, %v608
        %v631 = vpop.permute.xlu0 %630
        %634 = vset.pattern.permute.xlu0 0
        %635 = vperm.xlu0 %634, %v609
        %v636 = vpop.permute.xlu0 %635
        %639 = vset.pattern.permute.xlu0 0
        %640 = vperm.xlu0 %639, %v610
        %v641 = vpop.permute.xlu0 %640
        %644 = vset.pattern.permute.xlu0 0
        %645 = vperm.xlu0 %644, %v611
        %v646 = vpop.permute.xlu0 %645
        %649 = vset.pattern.permute.xlu0 0
        %650 = vperm.xlu0 %649, %v612
        %v651 = vpop.permute.xlu0 %650
        %v661 = vunpack.c.l.b16 %v597
        %v662 = vunpack.c.l.b16 %v598
        %v663 = vunpack.c.l.b16 %v599
        %v664 = vunpack.c.l.b16 %v600
        %v665 = vunpack.c.l.b16 %v601
        %v666 = vunpack.c.l.b16 %v602
        %v667 = vunpack.c.l.b16 %v603
        %v668 = vunpack.c.l.b16 %v604
        %v669 = vpack.c.b16 %v662, %v661
        %v670 = vpack.c.b16 %v664, %v663
        %v671 = vpack.c.b16 %v666, %v665
        %v672 = vpack.c.b16 %v668, %v667
        %vm673 = vcmask 523264
        %v675 = vsel %vm673, %v669, 0
        %v678 = vsel %vm673, %v670, 0
        %v681 = vsel %vm673, %v671, 0
        %v684 = vsel %vm673, %v672, 0
        %686 = vmatpush.bf16.msra.mxu0 0
        %687 = vmatpush.bf16.msra.mxu0 0
        %688 = vmatpush.bf16.msra.mxu0 0
        %689 = vmatpush.bf16.msra.mxu0 0
        %690 = vmatpush.bf16.msra.mxu0 %v595
        %691 = vmatpush.bf16.msra.mxu0 %v593
        %692 = vmatpush.bf16.msra.mxu0 %v591
        %693 = vmatpush.bf16.msra.mxu0 %v589
        %694 = vmatmul.bf16.gmra.mxu0 %v675
        %v695 = vpop.f32.mrf.mxu0
        %v696 = vadd.f32 %v616, %v695
        %v697 = vpop.f32.mrf.mxu0
        %v698 = vadd.f32 %v621, %v697
        %699 = vmatmul.bf16.gmra.mxu0 %v678
        %v700 = vpop.f32.mrf.mxu0
        %v701 = vadd.f32 %v626, %v700
        %v702 = vpop.f32.mrf.mxu0
        %v703 = vadd.f32 %v631, %v702
        %704 = vmatmul.bf16.gmra.mxu0 %v681
        %v705 = vpop.f32.mrf.mxu0
        %v706 = vadd.f32 %v636, %v705
        %v707 = vpop.f32.mrf.mxu0
        %v708 = vadd.f32 %v641, %v707
        %709 = vmatmul.bf16.gmra.mxu0 %v684
        %v710 = vpop.f32.mrf.mxu0
        %v711 = vadd.f32 %v646, %v710
        %v712 = vpop.f32.mrf.mxu0
        %v713 = vadd.f32 %v651, %v712
        %714 = vdwg.mxu0
        %715 = vmatpush.bf16.msra.mxu0 0
        %716 = vmatpush.bf16.msra.mxu0 0
        %717 = vmatpush.bf16.msra.mxu0 0
        %718 = vmatpush.bf16.msra.mxu0 0
        %719 = vmatpush.bf16.msra.mxu0 %v596
        %720 = vmatpush.bf16.msra.mxu0 %v594
        %721 = vmatpush.bf16.msra.mxu0 %v592
        %722 = vmatpush.bf16.msra.mxu0 %v590
        %723 = vmatmul.bf16.gmra.mxu0 %v675
        %v724 = vpop.f32.mrf.mxu0
        %v725 = vadd.f32 %v616, %v724
        %v726 = vpop.f32.mrf.mxu0
        %v727 = vadd.f32 %v621, %v726
        %728 = vmatmul.bf16.gmra.mxu0 %v678
        %v729 = vpop.f32.mrf.mxu0
        %v730 = vadd.f32 %v626, %v729
        %v731 = vpop.f32.mrf.mxu0
        %v732 = vadd.f32 %v631, %v731
        %733 = vmatmul.bf16.gmra.mxu0 %v681
        %v734 = vpop.f32.mrf.mxu0
        %v735 = vadd.f32 %v636, %v734
        %v736 = vpop.f32.mrf.mxu0
        %v737 = vadd.f32 %v641, %v736
        %738 = vmatmul.bf16.gmra.mxu0 %v684
        %v739 = vpop.f32.mrf.mxu0
        %v740 = vadd.f32 %v646, %v739
        %v741 = vpop.f32.mrf.mxu0
        %v742 = vadd.f32 %v651, %v741
        %743 = vdwg.mxu0
        %v744 = vmax.f32 %v696, 0.0
        %v745 = vmax.f32 %v725, 0.0
        %v746 = vmax.f32 %v698, 0.0
        %v747 = vmax.f32 %v727, 0.0
        %v748 = vmax.f32 %v701, 0.0
        %v749 = vmax.f32 %v730, 0.0
        %v750 = vmax.f32 %v703, 0.0
        %v751 = vmax.f32 %v732, 0.0
        %v752 = vmax.f32 %v706, 0.0
        %v753 = vmax.f32 %v735, 0.0
        %v754 = vmax.f32 %v708, 0.0
        %v755 = vmax.f32 %v737, 0.0
        %v756 = vmax.f32 %v711, 0.0
        %v757 = vmax.f32 %v740, 0.0
        %v758 = vmax.f32 %v713, 0.0
        %v759 = vmax.f32 %v742, 0.0
        %v760 = vpack.c.bf16 %v746, %v744
        %v761 = vpack.c.bf16 %v747, %v745
        %v762 = vpack.c.bf16 %v750, %v748
        %v763 = vpack.c.bf16 %v751, %v749
        %v764 = vpack.c.bf16 %v754, %v752
        %v765 = vpack.c.bf16 %v755, %v753
        %v766 = vpack.c.bf16 %v758, %v756
        %v767 = vpack.c.bf16 %v759, %v757
        %v768 = vld [vmem:[%s5] sm:$0xf]
        %v769 = vld [vmem:[%s5 + $0x4] sm:$0xf]
        %v770 = vld [vmem:[%s5 + $0x8] sm:$0xf]
        %v771 = vld [vmem:[%s5 + $0xc] sm:$0xf]
        %v772 = vld [vmem:[%s5 + $0x10] sm:$0xf]
        %v773 = vld [vmem:[%s5 + $0x14] sm:$0xf]
        %v774 = vld [vmem:[%s5 + $0x18] sm:$0xf]
        %v775 = vld [vmem:[%s5 + $0x1c] sm:$0xf]
        %v776 = vld [vmem:[%s6] sm:$0xff]
        %v777 = vld [vmem:[%s6 + $0x8] sm:$0xff]
        %v778 = vld [vmem:[%s6 + $0x10] sm:$0xff]
        %v779 = vld [vmem:[%s6 + $0x18] sm:$0xff]
        %v780 = vld [vmem:[%s6 + $0x20] sm:$0xff]
        %v781 = vld [vmem:[%s6 + $0x28] sm:$0xff]
        %v782 = vld [vmem:[%s6 + $0x30] sm:$0xff]
        %v783 = vld [vmem:[%s6 + $0x38] sm:$0xff]
        %785 = vset.pattern.permute.xlu0 0
        %786 = vperm.xlu0 %785, %v776
        %v787 = vpop.permute.xlu0 %786
        %790 = vset.pattern.permute.xlu0 0
        %791 = vperm.xlu0 %790, %v777
        %v792 = vpop.permute.xlu0 %791
        %795 = vset.pattern.permute.xlu0 0
        %796 = vperm.xlu0 %795, %v778
        %v797 = vpop.permute.xlu0 %796
        %800 = vset.pattern.permute.xlu0 0
        %801 = vperm.xlu0 %800, %v779
        %v802 = vpop.permute.xlu0 %801
        %805 = vset.pattern.permute.xlu0 0
        %806 = vperm.xlu0 %805, %v780
        %v807 = vpop.permute.xlu0 %806
        %810 = vset.pattern.permute.xlu0 0
        %811 = vperm.xlu0 %810, %v781
        %v812 = vpop.permute.xlu0 %811
        %815 = vset.pattern.permute.xlu0 0
        %816 = vperm.xlu0 %815, %v782
        %v817 = vpop.permute.xlu0 %816
        %820 = vset.pattern.permute.xlu0 0
        %821 = vperm.xlu0 %820, %v783
        %v822 = vpop.permute.xlu0 %821
        %v832 = vunpack.c.l.b16 %v768
        %v833 = vunpack.c.l.b16 %v769
        %v834 = vunpack.c.l.b16 %v770
        %v835 = vunpack.c.l.b16 %v771
        %v836 = vunpack.c.l.b16 %v772
        %v837 = vunpack.c.l.b16 %v773
        %v838 = vunpack.c.l.b16 %v774
        %v839 = vunpack.c.l.b16 %v775
        %v840 = vpack.c.b16 %v833, %v832
        %v841 = vpack.c.b16 %v835, %v834
        %v842 = vpack.c.b16 %v837, %v836
        %v843 = vpack.c.b16 %v839, %v838
        %v845 = vsel %vm673, %v840, 0
        %v848 = vsel %vm673, %v841, 0
        %v851 = vsel %vm673, %v842, 0
        %v854 = vsel %vm673, %v843, 0
        %856 = vmatpush.bf16.msra.mxu0 0
        %857 = vmatpush.bf16.msra.mxu0 0
        %858 = vmatpush.bf16.msra.mxu0 0
        %859 = vmatpush.bf16.msra.mxu0 0
        %860 = vmatpush.bf16.msra.mxu0 %v766
        %861 = vmatpush.bf16.msra.mxu0 %v764
        %862 = vmatpush.bf16.msra.mxu0 %v762
        %863 = vmatpush.bf16.msra.mxu0 %v760
        %864 = vmatmul.bf16.gmra.mxu0 %v845
        %v865 = vpop.f32.mrf.mxu0
        %v866 = vadd.f32 %v787, %v865
        %v867 = vpop.f32.mrf.mxu0
        %v868 = vadd.f32 %v792, %v867
        %869 = vmatmul.bf16.gmra.mxu0 %v848
        %v870 = vpop.f32.mrf.mxu0
        %v871 = vadd.f32 %v797, %v870
        %v872 = vpop.f32.mrf.mxu0
        %v873 = vadd.f32 %v802, %v872
        %874 = vmatmul.bf16.gmra.mxu0 %v851
        %v875 = vpop.f32.mrf.mxu0
        %v876 = vadd.f32 %v807, %v875
        %v877 = vpop.f32.mrf.mxu0
        %v878 = vadd.f32 %v812, %v877
        %879 = vmatmul.bf16.gmra.mxu0 %v854
        %v880 = vpop.f32.mrf.mxu0
        %v881 = vadd.f32 %v817, %v880
        %v882 = vpop.f32.mrf.mxu0
        %v883 = vadd.f32 %v822, %v882
        %884 = vdwg.mxu0
        %885 = vmatpush.bf16.msra.mxu0 0
        %886 = vmatpush.bf16.msra.mxu0 0
        %887 = vmatpush.bf16.msra.mxu0 0
        %888 = vmatpush.bf16.msra.mxu0 0
        %889 = vmatpush.bf16.msra.mxu0 %v767
        %890 = vmatpush.bf16.msra.mxu0 %v765
        %891 = vmatpush.bf16.msra.mxu0 %v763
        %892 = vmatpush.bf16.msra.mxu0 %v761
        %893 = vmatmul.bf16.gmra.mxu0 %v845
        %v894 = vpop.f32.mrf.mxu0
        %v895 = vadd.f32 %v787, %v894
        %v896 = vpop.f32.mrf.mxu0
        %v897 = vadd.f32 %v792, %v896
        %898 = vmatmul.bf16.gmra.mxu0 %v848
        %v899 = vpop.f32.mrf.mxu0
        %v900 = vadd.f32 %v797, %v899
        %v901 = vpop.f32.mrf.mxu0
        %v902 = vadd.f32 %v802, %v901
        %903 = vmatmul.bf16.gmra.mxu0 %v851
        %v904 = vpop.f32.mrf.mxu0
        %v905 = vadd.f32 %v807, %v904
        %v906 = vpop.f32.mrf.mxu0
        %v907 = vadd.f32 %v812, %v906
        %908 = vmatmul.bf16.gmra.mxu0 %v854
        %v909 = vpop.f32.mrf.mxu0
        %v910 = vadd.f32 %v817, %v909
        %v911 = vpop.f32.mrf.mxu0
        %v912 = vadd.f32 %v822, %v911
        %913 = vdwg.mxu0
        %v914 = vmax.f32 %v866, 0.0
        %v915 = vmax.f32 %v895, 0.0
        %v916 = vmax.f32 %v868, 0.0
        %v917 = vmax.f32 %v897, 0.0
        %v918 = vmax.f32 %v871, 0.0
        %v919 = vmax.f32 %v900, 0.0
        %v920 = vmax.f32 %v873, 0.0
        %v921 = vmax.f32 %v902, 0.0
        %v922 = vmax.f32 %v876, 0.0
        %v923 = vmax.f32 %v905, 0.0
        %v924 = vmax.f32 %v878, 0.0
        %v925 = vmax.f32 %v907, 0.0
        %v926 = vmax.f32 %v881, 0.0
        %v927 = vmax.f32 %v910, 0.0
        %v928 = vmax.f32 %v883, 0.0
        %v929 = vmax.f32 %v912, 0.0
        %v930 = vpack.c.bf16 %v916, %v914
        %v931 = vpack.c.bf16 %v917, %v915
        %v932 = vpack.c.bf16 %v920, %v918
        %v933 = vpack.c.bf16 %v921, %v919
        %v934 = vpack.c.bf16 %v924, %v922
        %v935 = vpack.c.bf16 %v925, %v923
        %v936 = vpack.c.bf16 %v928, %v926
        %v937 = vpack.c.bf16 %v929, %v927
        %v938 = vld [vmem:[%s7] sm:$0xf]
        %v939 = vld [vmem:[%s7 + $0x4] sm:$0xf]
        %v940 = vld [vmem:[%s7 + $0x8] sm:$0xf]
        %v941 = vld [vmem:[%s7 + $0xc] sm:$0xf]
        %v942 = vld [vmem:[%s7 + $0x10] sm:$0xf]
        %v943 = vld [vmem:[%s7 + $0x14] sm:$0xf]
        %v944 = vld [vmem:[%s7 + $0x18] sm:$0xf]
        %v945 = vld [vmem:[%s7 + $0x1c] sm:$0xf]
        %v946 = vld [vmem:[%s7 + $0x20] sm:$0xf]
        %v947 = vld [vmem:[%s7 + $0x24] sm:$0xf]
        %v948 = vld [vmem:[%s7 + $0x28] sm:$0xf]
        %v949 = vld [vmem:[%s7 + $0x2c] sm:$0xf]
        %v950 = vld [vmem:[%s7 + $0x30] sm:$0xf]
        %v951 = vld [vmem:[%s7 + $0x34] sm:$0xf]
        %v952 = vld [vmem:[%s7 + $0x38] sm:$0xf]
        %v953 = vld [vmem:[%s7 + $0x3c] sm:$0xf]
        %v954 = vld [vmem:[%s8] sm:$0xff]
        %v955 = vld [vmem:[%s8 + $0x8] sm:$0xff]
        %v956 = vld [vmem:[%s8 + $0x10] sm:$0xff]
        %v957 = vld [vmem:[%s8 + $0x18] sm:$0xff]
        %v958 = vld [vmem:[%s8 + $0x20] sm:$0xff]
        %v959 = vld [vmem:[%s8 + $0x28] sm:$0xff]
        %v960 = vld [vmem:[%s8 + $0x30] sm:$0xff]
        %v961 = vld [vmem:[%s8 + $0x38] sm:$0xff]
        %v962 = vld [vmem:[%s8 + $0x40] sm:$0xff]
        %v963 = vld [vmem:[%s8 + $0x48] sm:$0xff]
        %v964 = vld [vmem:[%s8 + $0x50] sm:$0xff]
        %v965 = vld [vmem:[%s8 + $0x58] sm:$0xff]
        %v966 = vld [vmem:[%s8 + $0x60] sm:$0xff]
        %v967 = vld [vmem:[%s8 + $0x68] sm:$0xff]
        %v968 = vld [vmem:[%s8 + $0x70] sm:$0xff]
        %v969 = vld [vmem:[%s8 + $0x78] sm:$0xff]
        %971 = vset.pattern.permute.xlu0 0
        %972 = vperm.xlu0 %971, %v954
        %v973 = vpop.permute.xlu0 %972
        %976 = vset.pattern.permute.xlu0 0
        %977 = vperm.xlu0 %976, %v955
        %v978 = vpop.permute.xlu0 %977
        %981 = vset.pattern.permute.xlu0 0
        %982 = vperm.xlu0 %981, %v956
        %v983 = vpop.permute.xlu0 %982
        %986 = vset.pattern.permute.xlu0 0
        %987 = vperm.xlu0 %986, %v957
        %v988 = vpop.permute.xlu0 %987
        %991 = vset.pattern.permute.xlu0 0
        %992 = vperm.xlu0 %991, %v958
        %v993 = vpop.permute.xlu0 %992
        %996 = vset.pattern.permute.xlu0 0
        %997 = vperm.xlu0 %996, %v959
        %v998 = vpop.permute.xlu0 %997
        %1001 = vset.pattern.permute.xlu0 0
        %1002 = vperm.xlu0 %1001, %v960
        %v1003 = vpop.permute.xlu0 %1002
        %1006 = vset.pattern.permute.xlu0 0
        %1007 = vperm.xlu0 %1006, %v961
        %v1008 = vpop.permute.xlu0 %1007
        %1011 = vset.pattern.permute.xlu0 0
        %1012 = vperm.xlu0 %1011, %v962
        %v1013 = vpop.permute.xlu0 %1012
        %1016 = vset.pattern.permute.xlu0 0
        %1017 = vperm.xlu0 %1016, %v963
        %v1018 = vpop.permute.xlu0 %1017
        %1021 = vset.pattern.permute.xlu0 0
        %1022 = vperm.xlu0 %1021, %v964
        %v1023 = vpop.permute.xlu0 %1022
        %1026 = vset.pattern.permute.xlu0 0
        %1027 = vperm.xlu0 %1026, %v965
        %v1028 = vpop.permute.xlu0 %1027
        %1031 = vset.pattern.permute.xlu0 0
        %1032 = vperm.xlu0 %1031, %v966
        %v1033 = vpop.permute.xlu0 %1032
        %1036 = vset.pattern.permute.xlu0 0
        %1037 = vperm.xlu0 %1036, %v967
        %v1038 = vpop.permute.xlu0 %1037
        %1041 = vset.pattern.permute.xlu0 0
        %1042 = vperm.xlu0 %1041, %v968
        %v1043 = vpop.permute.xlu0 %1042
        %1046 = vset.pattern.permute.xlu0 0
        %1047 = vperm.xlu0 %1046, %v969
        %v1048 = vpop.permute.xlu0 %1047
        %v1066 = vunpack.c.l.b16 %v938
        %v1067 = vunpack.c.l.b16 %v939
        %v1068 = vunpack.c.l.b16 %v940
        %v1069 = vunpack.c.l.b16 %v941
        %v1070 = vunpack.c.l.b16 %v942
        %v1071 = vunpack.c.l.b16 %v943
        %v1072 = vunpack.c.l.b16 %v944
        %v1073 = vunpack.c.l.b16 %v945
        %v1074 = vunpack.c.l.b16 %v946
        %v1075 = vunpack.c.l.b16 %v947
        %v1076 = vunpack.c.l.b16 %v948
        %v1077 = vunpack.c.l.b16 %v949
        %v1078 = vunpack.c.l.b16 %v950
        %v1079 = vunpack.c.l.b16 %v951
        %v1080 = vunpack.c.l.b16 %v952
        %v1081 = vunpack.c.l.b16 %v953
        %v1082 = vpack.c.b16 %v1067, %v1066
        %v1083 = vpack.c.b16 %v1069, %v1068
        %v1084 = vpack.c.b16 %v1071, %v1070
        %v1085 = vpack.c.b16 %v1073, %v1072
        %v1086 = vpack.c.b16 %v1075, %v1074
        %v1087 = vpack.c.b16 %v1077, %v1076
        %v1088 = vpack.c.b16 %v1079, %v1078
        %v1089 = vpack.c.b16 %v1081, %v1080
        %v1091 = vsel %vm673, %v1082, 0
        %v1094 = vsel %vm673, %v1083, 0
        %v1097 = vsel %vm673, %v1084, 0
        %v1100 = vsel %vm673, %v1085, 0
        %v1103 = vsel %vm673, %v1086, 0
        %v1106 = vsel %vm673, %v1087, 0
        %v1109 = vsel %vm673, %v1088, 0
        %v1112 = vsel %vm673, %v1089, 0
        %1114 = vmatpush.bf16.msra.mxu0 0
        %1115 = vmatpush.bf16.msra.mxu0 0
        %1116 = vmatpush.bf16.msra.mxu0 0
        %1117 = vmatpush.bf16.msra.mxu0 0
        %1118 = vmatpush.bf16.msra.mxu0 %v936
        %1119 = vmatpush.bf16.msra.mxu0 %v934
        %1120 = vmatpush.bf16.msra.mxu0 %v932
        %1121 = vmatpush.bf16.msra.mxu0 %v930
        %1122 = vmatmul.bf16.gmra.mxu0 %v1091
        %v1123 = vpop.f32.mrf.mxu0
        %v1124 = vadd.f32 %v973, %v1123
        %v1125 = vpop.f32.mrf.mxu0
        %v1126 = vadd.f32 %v978, %v1125
        %1127 = vmatmul.bf16.gmra.mxu0 %v1094
        %v1128 = vpop.f32.mrf.mxu0
        %v1129 = vadd.f32 %v983, %v1128
        %v1130 = vpop.f32.mrf.mxu0
        %v1131 = vadd.f32 %v988, %v1130
        %1132 = vmatmul.bf16.gmra.mxu0 %v1097
        %v1133 = vpop.f32.mrf.mxu0
        %v1134 = vadd.f32 %v993, %v1133
        %v1135 = vpop.f32.mrf.mxu0
        %v1136 = vadd.f32 %v998, %v1135
        %1137 = vmatmul.bf16.gmra.mxu0 %v1100
        %v1138 = vpop.f32.mrf.mxu0
        %v1139 = vadd.f32 %v1003, %v1138
        %v1140 = vpop.f32.mrf.mxu0
        %v1141 = vadd.f32 %v1008, %v1140
        %1142 = vmatmul.bf16.gmra.mxu0 %v1103
        %v1143 = vpop.f32.mrf.mxu0
        %v1144 = vadd.f32 %v1013, %v1143
        %v1145 = vpop.f32.mrf.mxu0
        %v1146 = vadd.f32 %v1018, %v1145
        %1147 = vmatmul.bf16.gmra.mxu0 %v1106
        %v1148 = vpop.f32.mrf.mxu0
        %v1149 = vadd.f32 %v1023, %v1148
        %v1150 = vpop.f32.mrf.mxu0
        %v1151 = vadd.f32 %v1028, %v1150
        %1152 = vmatmul.bf16.gmra.mxu0 %v1109
        %v1153 = vpop.f32.mrf.mxu0
        %v1154 = vadd.f32 %v1033, %v1153
        %v1155 = vpop.f32.mrf.mxu0
        %v1156 = vadd.f32 %v1038, %v1155
        %1157 = vmatmul.bf16.gmra.mxu0 %v1112
        %v1158 = vpop.f32.mrf.mxu0
        %v1159 = vadd.f32 %v1043, %v1158
        %v1160 = vpop.f32.mrf.mxu0
        %v1161 = vadd.f32 %v1048, %v1160
        %1162 = vdwg.mxu0
        %1163 = vmatpush.bf16.msra.mxu0 0
        %1164 = vmatpush.bf16.msra.mxu0 0
        %1165 = vmatpush.bf16.msra.mxu0 0
        %1166 = vmatpush.bf16.msra.mxu0 0
        %1167 = vmatpush.bf16.msra.mxu0 %v937
        %1168 = vmatpush.bf16.msra.mxu0 %v935
        %1169 = vmatpush.bf16.msra.mxu0 %v933
        %1170 = vmatpush.bf16.msra.mxu0 %v931
        %1171 = vmatmul.bf16.gmra.mxu0 %v1091
        %v1172 = vpop.f32.mrf.mxu0
        %v1173 = vadd.f32 %v973, %v1172
        %v1174 = vpop.f32.mrf.mxu0
        %v1175 = vadd.f32 %v978, %v1174
        %1176 = vmatmul.bf16.gmra.mxu0 %v1094
        %v1177 = vpop.f32.mrf.mxu0
        %v1178 = vadd.f32 %v983, %v1177
        %v1179 = vpop.f32.mrf.mxu0
        %v1180 = vadd.f32 %v988, %v1179
        %1181 = vmatmul.bf16.gmra.mxu0 %v1097
        %v1182 = vpop.f32.mrf.mxu0
        %v1183 = vadd.f32 %v993, %v1182
        %v1184 = vpop.f32.mrf.mxu0
        %v1185 = vadd.f32 %v998, %v1184
        %1186 = vmatmul.bf16.gmra.mxu0 %v1100
        %v1187 = vpop.f32.mrf.mxu0
        %v1188 = vadd.f32 %v1003, %v1187
        %v1189 = vpop.f32.mrf.mxu0
        %v1190 = vadd.f32 %v1008, %v1189
        %1191 = vmatmul.bf16.gmra.mxu0 %v1103
        %v1192 = vpop.f32.mrf.mxu0
        %v1193 = vadd.f32 %v1013, %v1192
        %v1194 = vpop.f32.mrf.mxu0
        %v1195 = vadd.f32 %v1018, %v1194
        %1196 = vmatmul.bf16.gmra.mxu0 %v1106
        %v1197 = vpop.f32.mrf.mxu0
        %v1198 = vadd.f32 %v1023, %v1197
        %v1199 = vpop.f32.mrf.mxu0
        %v1200 = vadd.f32 %v1028, %v1199
        %1201 = vmatmul.bf16.gmra.mxu0 %v1109
        %v1202 = vpop.f32.mrf.mxu0
        %v1203 = vadd.f32 %v1033, %v1202
        %v1204 = vpop.f32.mrf.mxu0
        %v1205 = vadd.f32 %v1038, %v1204
        %1206 = vmatmul.bf16.gmra.mxu0 %v1112
        %v1207 = vpop.f32.mrf.mxu0
        %v1208 = vadd.f32 %v1043, %v1207
        %v1209 = vpop.f32.mrf.mxu0
        %v1210 = vadd.f32 %v1048, %v1209
        %1211 = vdwg.mxu0
        %v1212 = vmax.f32 %v1124, 0.0
        %v1213 = vmax.f32 %v1173, 0.0
        %v1214 = vmax.f32 %v1126, 0.0
        %v1215 = vmax.f32 %v1175, 0.0
        %v1216 = vmax.f32 %v1129, 0.0
        %v1217 = vmax.f32 %v1178, 0.0
        %v1218 = vmax.f32 %v1131, 0.0
        %v1219 = vmax.f32 %v1180, 0.0
        %v1220 = vmax.f32 %v1134, 0.0
        %v1221 = vmax.f32 %v1183, 0.0
        %v1222 = vmax.f32 %v1136, 0.0
        %v1223 = vmax.f32 %v1185, 0.0
        %v1224 = vmax.f32 %v1139, 0.0
        %v1225 = vmax.f32 %v1188, 0.0
        %v1226 = vmax.f32 %v1141, 0.0
        %v1227 = vmax.f32 %v1190, 0.0
        %v1228 = vmax.f32 %v1144, 0.0
        %v1229 = vmax.f32 %v1193, 0.0
        %v1230 = vmax.f32 %v1146, 0.0
        %v1231 = vmax.f32 %v1195, 0.0
        %v1232 = vmax.f32 %v1149, 0.0
        %v1233 = vmax.f32 %v1198, 0.0
        %v1234 = vmax.f32 %v1151, 0.0
        %v1235 = vmax.f32 %v1200, 0.0
        %v1236 = vmax.f32 %v1154, 0.0
        %v1237 = vmax.f32 %v1203, 0.0
        %v1238 = vmax.f32 %v1156, 0.0
        %v1239 = vmax.f32 %v1205, 0.0
        %v1240 = vmax.f32 %v1159, 0.0
        %v1241 = vmax.f32 %v1208, 0.0
        %v1242 = vmax.f32 %v1161, 0.0
        %v1243 = vmax.f32 %v1210, 0.0
        %v1244 = vpack.c.bf16 %v1214, %v1212
        %v1245 = vpack.c.bf16 %v1215, %v1213
        %v1246 = vpack.c.bf16 %v1218, %v1216
        %v1247 = vpack.c.bf16 %v1219, %v1217
        %v1248 = vpack.c.bf16 %v1222, %v1220
        %v1249 = vpack.c.bf16 %v1223, %v1221
        %v1250 = vpack.c.bf16 %v1226, %v1224
        %v1251 = vpack.c.bf16 %v1227, %v1225
        %v1252 = vpack.c.bf16 %v1230, %v1228
        %v1253 = vpack.c.bf16 %v1231, %v1229
        %v1254 = vpack.c.bf16 %v1234, %v1232
        %v1255 = vpack.c.bf16 %v1235, %v1233
        %v1256 = vpack.c.bf16 %v1238, %v1236
        %v1257 = vpack.c.bf16 %v1239, %v1237
        %v1258 = vpack.c.bf16 %v1242, %v1240
        %v1259 = vpack.c.bf16 %v1243, %v1241
        %v1260 = vld [vmem:[%s9] sm:$0xf]
        %v1261 = vld [vmem:[%s9 + $0x4] sm:$0xf]
        %v1262 = vld [vmem:[%s9 + $0x8] sm:$0xf]
        %v1263 = vld [vmem:[%s9 + $0xc] sm:$0xf]
        %v1264 = vld [vmem:[%s9 + $0x10] sm:$0xf]
        %v1265 = vld [vmem:[%s9 + $0x14] sm:$0xf]
        %v1266 = vld [vmem:[%s9 + $0x18] sm:$0xf]
        %v1267 = vld [vmem:[%s9 + $0x1c] sm:$0xf]
        %v1268 = vld [vmem:[%s9 + $0x20] sm:$0xf]
        %v1269 = vld [vmem:[%s9 + $0x24] sm:$0xf]
        %v1270 = vld [vmem:[%s9 + $0x28] sm:$0xf]
        %v1271 = vld [vmem:[%s9 + $0x2c] sm:$0xf]
        %v1272 = vld [vmem:[%s9 + $0x30] sm:$0xf]
        %v1273 = vld [vmem:[%s9 + $0x34] sm:$0xf]
        %v1274 = vld [vmem:[%s9 + $0x38] sm:$0xf]
        %v1275 = vld [vmem:[%s9 + $0x3c] sm:$0xf]
        %v1276 = vld [vmem:[%s9 + $0x40] sm:$0xf]
        %v1277 = vld [vmem:[%s9 + $0x44] sm:$0xf]
        %v1278 = vld [vmem:[%s9 + $0x48] sm:$0xf]
        %v1279 = vld [vmem:[%s9 + $0x4c] sm:$0xf]
        %v1280 = vld [vmem:[%s9 + $0x50] sm:$0xf]
        %v1281 = vld [vmem:[%s9 + $0x54] sm:$0xf]
        %v1282 = vld [vmem:[%s9 + $0x58] sm:$0xf]
        %v1283 = vld [vmem:[%s9 + $0x5c] sm:$0xf]
        %v1284 = vld [vmem:[%s9 + $0x60] sm:$0xf]
        %v1285 = vld [vmem:[%s9 + $0x64] sm:$0xf]
        %v1286 = vld [vmem:[%s9 + $0x68] sm:$0xf]
        %v1287 = vld [vmem:[%s9 + $0x6c] sm:$0xf]
        %v1288 = vld [vmem:[%s9 + $0x70] sm:$0xf]
        %v1289 = vld [vmem:[%s9 + $0x74] sm:$0xf]
        %v1290 = vld [vmem:[%s9 + $0x78] sm:$0xf]
        %v1291 = vld [vmem:[%s9 + $0x7c] sm:$0xf]
        %v1292 = vld [vmem:[%s10] sm:$0xff]
        %v1293 = vld [vmem:[%s10 + $0x8] sm:$0xff]
        %v1294 = vld [vmem:[%s10 + $0x10] sm:$0xff]
        %v1295 = vld [vmem:[%s10 + $0x18] sm:$0xff]
        %v1296 = vld [vmem:[%s10 + $0x20] sm:$0xff]
        %v1297 = vld [vmem:[%s10 + $0x28] sm:$0xff]
        %v1298 = vld [vmem:[%s10 + $0x30] sm:$0xff]
        %v1299 = vld [vmem:[%s10 + $0x38] sm:$0xff]
        %v1300 = vld [vmem:[%s10 + $0x40] sm:$0xff]
        %v1301 = vld [vmem:[%s10 + $0x48] sm:$0xff]
        %v1302 = vld [vmem:[%s10 + $0x50] sm:$0xff]
        %v1303 = vld [vmem:[%s10 + $0x58] sm:$0xff]
        %v1304 = vld [vmem:[%s10 + $0x60] sm:$0xff]
        %v1305 = vld [vmem:[%s10 + $0x68] sm:$0xff]
        %v1306 = vld [vmem:[%s10 + $0x70] sm:$0xff]
        %v1307 = vld [vmem:[%s10 + $0x78] sm:$0xff]
        %v1308 = vld [vmem:[%s10 + $0x80] sm:$0xff]
        %v1309 = vld [vmem:[%s10 + $0x88] sm:$0xff]
        %v1310 = vld [vmem:[%s10 + $0x90] sm:$0xff]
        %v1311 = vld [vmem:[%s10 + $0x98] sm:$0xff]
        %v1312 = vld [vmem:[%s10 + $0xa0] sm:$0xff]
        %v1313 = vld [vmem:[%s10 + $0xa8] sm:$0xff]
        %v1314 = vld [vmem:[%s10 + $0xb0] sm:$0xff]
        %v1315 = vld [vmem:[%s10 + $0xb8] sm:$0xff]
        %v1316 = vld [vmem:[%s10 + $0xc0] sm:$0xff]
        %v1317 = vld [vmem:[%s10 + $0xc8] sm:$0xff]
        %v1318 = vld [vmem:[%s10 + $0xd0] sm:$0xff]
        %v1319 = vld [vmem:[%s10 + $0xd8] sm:$0xff]
        %v1320 = vld [vmem:[%s10 + $0xe0] sm:$0xff]
        %v1321 = vld [vmem:[%s10 + $0xe8] sm:$0xff]
        %v1322 = vld [vmem:[%s10 + $0xf0] sm:$0xff]
        %v1323 = vld [vmem:[%s10 + $0xf8] sm:$0xff]
        %1325 = vset.pattern.permute.xlu0 0
        %1326 = vperm.xlu0 %1325, %v1292
        %v1327 = vpop.permute.xlu0 %1326
        %1330 = vset.pattern.permute.xlu0 0
        %1331 = vperm.xlu0 %1330, %v1293
        %v1332 = vpop.permute.xlu0 %1331
        %1335 = vset.pattern.permute.xlu0 0
        %1336 = vperm.xlu0 %1335, %v1294
        %v1337 = vpop.permute.xlu0 %1336
        %1340 = vset.pattern.permute.xlu0 0
        %1341 = vperm.xlu0 %1340, %v1295
        %v1342 = vpop.permute.xlu0 %1341
        %1345 = vset.pattern.permute.xlu0 0
        %1346 = vperm.xlu0 %1345, %v1296
        %v1347 = vpop.permute.xlu0 %1346
        %1350 = vset.pattern.permute.xlu0 0
        %1351 = vperm.xlu0 %1350, %v1297
        %v1352 = vpop.permute.xlu0 %1351
        %1355 = vset.pattern.permute.xlu0 0
        %1356 = vperm.xlu0 %1355, %v1298
        %v1357 = vpop.permute.xlu0 %1356
        %1360 = vset.pattern.permute.xlu0 0
        %1361 = vperm.xlu0 %1360, %v1299
        %v1362 = vpop.permute.xlu0 %1361
        %1365 = vset.pattern.permute.xlu0 0
        %1366 = vperm.xlu0 %1365, %v1300
        %v1367 = vpop.permute.xlu0 %1366
        %1370 = vset.pattern.permute.xlu0 0
        %1371 = vperm.xlu0 %1370, %v1301
        %v1372 = vpop.permute.xlu0 %1371
        %1375 = vset.pattern.permute.xlu0 0
        %1376 = vperm.xlu0 %1375, %v1302
        %v1377 = vpop.permute.xlu0 %1376
        %1380 = vset.pattern.permute.xlu0 0
        %1381 = vperm.xlu0 %1380, %v1303
        %v1382 = vpop.permute.xlu0 %1381
        %1385 = vset.pattern.permute.xlu0 0
        %1386 = vperm.xlu0 %1385, %v1304
        %v1387 = vpop.permute.xlu0 %1386
        %1390 = vset.pattern.permute.xlu0 0
        %1391 = vperm.xlu0 %1390, %v1305
        %v1392 = vpop.permute.xlu0 %1391
        %1395 = vset.pattern.permute.xlu0 0
        %1396 = vperm.xlu0 %1395, %v1306
        %v1397 = vpop.permute.xlu0 %1396
        %1400 = vset.pattern.permute.xlu0 0
        %1401 = vperm.xlu0 %1400, %v1307
        %v1402 = vpop.permute.xlu0 %1401
        %1405 = vset.pattern.permute.xlu0 0
        %1406 = vperm.xlu0 %1405, %v1308
        %v1407 = vpop.permute.xlu0 %1406
        %1410 = vset.pattern.permute.xlu0 0
        %1411 = vperm.xlu0 %1410, %v1309
        %v1412 = vpop.permute.xlu0 %1411
        %1415 = vset.pattern.permute.xlu0 0
        %1416 = vperm.xlu0 %1415, %v1310
        %v1417 = vpop.permute.xlu0 %1416
        %1420 = vset.pattern.permute.xlu0 0
        %1421 = vperm.xlu0 %1420, %v1311
        %v1422 = vpop.permute.xlu0 %1421
        %1425 = vset.pattern.permute.xlu0 0
        %1426 = vperm.xlu0 %1425, %v1312
        %v1427 = vpop.permute.xlu0 %1426
        %1430 = vset.pattern.permute.xlu0 0
        %1431 = vperm.xlu0 %1430, %v1313
        %v1432 = vpop.permute.xlu0 %1431
        %1435 = vset.pattern.permute.xlu0 0
        %1436 = vperm.xlu0 %1435, %v1314
        %v1437 = vpop.permute.xlu0 %1436
        %1440 = vset.pattern.permute.xlu0 0
        %1441 = vperm.xlu0 %1440, %v1315
        %v1442 = vpop.permute.xlu0 %1441
        %1445 = vset.pattern.permute.xlu0 0
        %1446 = vperm.xlu0 %1445, %v1316
        %v1447 = vpop.permute.xlu0 %1446
        %1450 = vset.pattern.permute.xlu0 0
        %1451 = vperm.xlu0 %1450, %v1317
        %v1452 = vpop.permute.xlu0 %1451
        %1455 = vset.pattern.permute.xlu0 0
        %1456 = vperm.xlu0 %1455, %v1318
        %v1457 = vpop.permute.xlu0 %1456
        %1460 = vset.pattern.permute.xlu0 0
        %1461 = vperm.xlu0 %1460, %v1319
        %v1462 = vpop.permute.xlu0 %1461
        %1465 = vset.pattern.permute.xlu0 0
        %1466 = vperm.xlu0 %1465, %v1320
        %v1467 = vpop.permute.xlu0 %1466
        %1470 = vset.pattern.permute.xlu0 0
        %1471 = vperm.xlu0 %1470, %v1321
        %v1472 = vpop.permute.xlu0 %1471
        %1475 = vset.pattern.permute.xlu0 0
        %1476 = vperm.xlu0 %1475, %v1322
        %v1477 = vpop.permute.xlu0 %1476
        %1480 = vset.pattern.permute.xlu0 0
        %1481 = vperm.xlu0 %1480, %v1323
        %v1482 = vpop.permute.xlu0 %1481
        %v1516 = vunpack.c.l.b16 %v1260
        %v1517 = vunpack.c.l.b16 %v1261
        %v1518 = vunpack.c.l.b16 %v1262
        %v1519 = vunpack.c.l.b16 %v1263
        %v1520 = vunpack.c.l.b16 %v1264
        %v1521 = vunpack.c.l.b16 %v1265
        %v1522 = vunpack.c.l.b16 %v1266
        %v1523 = vunpack.c.l.b16 %v1267
        %v1524 = vunpack.c.l.b16 %v1268
        %v1525 = vunpack.c.l.b16 %v1269
        %v1526 = vunpack.c.l.b16 %v1270
        %v1527 = vunpack.c.l.b16 %v1271
        %v1528 = vunpack.c.l.b16 %v1272
        %v1529 = vunpack.c.l.b16 %v1273
        %v1530 = vunpack.c.l.b16 %v1274
        %v1531 = vunpack.c.l.b16 %v1275
        %v1532 = vunpack.c.l.b16 %v1276
        %v1533 = vunpack.c.l.b16 %v1277
        %v1534 = vunpack.c.l.b16 %v1278
        %v1535 = vunpack.c.l.b16 %v1279
        %v1536 = vunpack.c.l.b16 %v1280
        %v1537 = vunpack.c.l.b16 %v1281
        %v1538 = vunpack.c.l.b16 %v1282
        %v1539 = vunpack.c.l.b16 %v1283
        %v1540 = vunpack.c.l.b16 %v1284
        %v1541 = vunpack.c.l.b16 %v1285
        %v1542 = vunpack.c.l.b16 %v1286
        %v1543 = vunpack.c.l.b16 %v1287
        %v1544 = vunpack.c.l.b16 %v1288
        %v1545 = vunpack.c.l.b16 %v1289
        %v1546 = vunpack.c.l.b16 %v1290
        %v1547 = vunpack.c.l.b16 %v1291
        %v1548 = vpack.c.b16 %v1517, %v1516
        %v1549 = vpack.c.b16 %v1519, %v1518
        %v1550 = vpack.c.b16 %v1521, %v1520
        %v1551 = vpack.c.b16 %v1523, %v1522
        %v1552 = vpack.c.b16 %v1525, %v1524
        %v1553 = vpack.c.b16 %v1527, %v1526
        %v1554 = vpack.c.b16 %v1529, %v1528
        %v1555 = vpack.c.b16 %v1531, %v1530
        %v1556 = vpack.c.b16 %v1533, %v1532
        %v1557 = vpack.c.b16 %v1535, %v1534
        %v1558 = vpack.c.b16 %v1537, %v1536
        %v1559 = vpack.c.b16 %v1539, %v1538
        %v1560 = vpack.c.b16 %v1541, %v1540
        %v1561 = vpack.c.b16 %v1543, %v1542
        %v1562 = vpack.c.b16 %v1545, %v1544
        %v1563 = vpack.c.b16 %v1547, %v1546
        %1580 = vmatpush.bf16.msra.mxu0 %v1258
        %1581 = vmatpush.bf16.msra.mxu0 %v1256
        %1582 = vmatpush.bf16.msra.mxu0 %v1254
        %1583 = vmatpush.bf16.msra.mxu0 %v1252
        %1584 = vmatpush.bf16.msra.mxu0 %v1250
        %1585 = vmatpush.bf16.msra.mxu0 %v1248
        %1586 = vmatpush.bf16.msra.mxu0 %v1246
        %1587 = vmatpush.bf16.msra.mxu0 %v1244
        %1588 = vmatmul.bf16.gmra.mxu0 %v1548
        %v1589 = vpop.f32.mrf.mxu0
        %v1590 = vadd.f32 %v1327, %v1589
        %v1591 = vpop.f32.mrf.mxu0
        %v1592 = vadd.f32 %v1332, %v1591
        %1593 = vmatmul.bf16.gmra.mxu0 %v1549
        %v1594 = vpop.f32.mrf.mxu0
        %v1595 = vadd.f32 %v1337, %v1594
        %v1596 = vpop.f32.mrf.mxu0
        %v1597 = vadd.f32 %v1342, %v1596
        %1598 = vmatmul.bf16.gmra.mxu0 %v1550
        %v1599 = vpop.f32.mrf.mxu0
        %v1600 = vadd.f32 %v1347, %v1599
        %v1601 = vpop.f32.mrf.mxu0
        %v1602 = vadd.f32 %v1352, %v1601
        %1603 = vmatmul.bf16.gmra.mxu0 %v1551
        %v1604 = vpop.f32.mrf.mxu0
        %v1605 = vadd.f32 %v1357, %v1604
        %v1606 = vpop.f32.mrf.mxu0
        %v1607 = vadd.f32 %v1362, %v1606
        %1608 = vmatmul.bf16.gmra.mxu0 %v1552
        %v1609 = vpop.f32.mrf.mxu0
        %v1610 = vadd.f32 %v1367, %v1609
        %v1611 = vpop.f32.mrf.mxu0
        %v1612 = vadd.f32 %v1372, %v1611
        %1613 = vmatmul.bf16.gmra.mxu0 %v1553
        %v1614 = vpop.f32.mrf.mxu0
        %v1615 = vadd.f32 %v1377, %v1614
        %v1616 = vpop.f32.mrf.mxu0
        %v1617 = vadd.f32 %v1382, %v1616
        %1618 = vmatmul.bf16.gmra.mxu0 %v1554
        %v1619 = vpop.f32.mrf.mxu0
        %v1620 = vadd.f32 %v1387, %v1619
        %v1621 = vpop.f32.mrf.mxu0
        %v1622 = vadd.f32 %v1392, %v1621
        %1623 = vmatmul.bf16.gmra.mxu0 %v1555
        %v1624 = vpop.f32.mrf.mxu0
        %v1625 = vadd.f32 %v1397, %v1624
        %v1626 = vpop.f32.mrf.mxu0
        %v1627 = vadd.f32 %v1402, %v1626
        %1628 = vmatmul.bf16.gmra.mxu0 %v1556
        %v1629 = vpop.f32.mrf.mxu0
        %v1630 = vadd.f32 %v1407, %v1629
        %v1631 = vpop.f32.mrf.mxu0
        %v1632 = vadd.f32 %v1412, %v1631
        %1633 = vmatmul.bf16.gmra.mxu0 %v1557
        %v1634 = vpop.f32.mrf.mxu0
        %v1635 = vadd.f32 %v1417, %v1634
        %v1636 = vpop.f32.mrf.mxu0
        %v1637 = vadd.f32 %v1422, %v1636
        %1638 = vmatmul.bf16.gmra.mxu0 %v1558
        %v1639 = vpop.f32.mrf.mxu0
        %v1640 = vadd.f32 %v1427, %v1639
        %v1641 = vpop.f32.mrf.mxu0
        %v1642 = vadd.f32 %v1432, %v1641
        %1643 = vmatmul.bf16.gmra.mxu0 %v1559
        %v1644 = vpop.f32.mrf.mxu0
        %v1645 = vadd.f32 %v1437, %v1644
        %v1646 = vpop.f32.mrf.mxu0
        %v1647 = vadd.f32 %v1442, %v1646
        %1648 = vmatmul.bf16.gmra.mxu0 %v1560
        %v1649 = vpop.f32.mrf.mxu0
        %v1650 = vadd.f32 %v1447, %v1649
        %v1651 = vpop.f32.mrf.mxu0
        %v1652 = vadd.f32 %v1452, %v1651
        %1653 = vmatmul.bf16.gmra.mxu0 %v1561
        %v1654 = vpop.f32.mrf.mxu0
        %v1655 = vadd.f32 %v1457, %v1654
        %v1656 = vpop.f32.mrf.mxu0
        %v1657 = vadd.f32 %v1462, %v1656
        %1658 = vmatmul.bf16.gmra.mxu0 %v1562
        %v1659 = vpop.f32.mrf.mxu0
        %v1660 = vadd.f32 %v1467, %v1659
        %v1661 = vpop.f32.mrf.mxu0
        %v1662 = vadd.f32 %v1472, %v1661
        %1663 = vmatmul.bf16.gmra.mxu0 %v1563
        %v1664 = vpop.f32.mrf.mxu0
        %v1665 = vadd.f32 %v1477, %v1664
        %v1666 = vpop.f32.mrf.mxu0
        %v1667 = vadd.f32 %v1482, %v1666
        %1668 = vdwg.mxu0
        %1669 = vmatpush.bf16.msra.mxu0 %v1259
        %1670 = vmatpush.bf16.msra.mxu0 %v1257
        %1671 = vmatpush.bf16.msra.mxu0 %v1255
        %1672 = vmatpush.bf16.msra.mxu0 %v1253
        %1673 = vmatpush.bf16.msra.mxu0 %v1251
        %1674 = vmatpush.bf16.msra.mxu0 %v1249
        %1675 = vmatpush.bf16.msra.mxu0 %v1247
        %1676 = vmatpush.bf16.msra.mxu0 %v1245
        %1677 = vmatmul.bf16.gmra.mxu0 %v1548
        %v1678 = vpop.f32.mrf.mxu0
        %v1679 = vadd.f32 %v1327, %v1678
        %v1680 = vpop.f32.mrf.mxu0
        %v1681 = vadd.f32 %v1332, %v1680
        %1682 = vmatmul.bf16.gmra.mxu0 %v1549
        %v1683 = vpop.f32.mrf.mxu0
        %v1684 = vadd.f32 %v1337, %v1683
        %v1685 = vpop.f32.mrf.mxu0
        %v1686 = vadd.f32 %v1342, %v1685
        %1687 = vmatmul.bf16.gmra.mxu0 %v1550
        %v1688 = vpop.f32.mrf.mxu0
        %v1689 = vadd.f32 %v1347, %v1688
        %v1690 = vpop.f32.mrf.mxu0
        %v1691 = vadd.f32 %v1352, %v1690
        %1692 = vmatmul.bf16.gmra.mxu0 %v1551
        %v1693 = vpop.f32.mrf.mxu0
        %v1694 = vadd.f32 %v1357, %v1693
        %v1695 = vpop.f32.mrf.mxu0
        %v1696 = vadd.f32 %v1362, %v1695
        %1697 = vmatmul.bf16.gmra.mxu0 %v1552
        %v1698 = vpop.f32.mrf.mxu0
        %v1699 = vadd.f32 %v1367, %v1698
        %v1700 = vpop.f32.mrf.mxu0
        %v1701 = vadd.f32 %v1372, %v1700
        %1702 = vmatmul.bf16.gmra.mxu0 %v1553
        %v1703 = vpop.f32.mrf.mxu0
        %v1704 = vadd.f32 %v1377, %v1703
        %v1705 = vpop.f32.mrf.mxu0
        %v1706 = vadd.f32 %v1382, %v1705
        %1707 = vmatmul.bf16.gmra.mxu0 %v1554
        %v1708 = vpop.f32.mrf.mxu0
        %v1709 = vadd.f32 %v1387, %v1708
        %v1710 = vpop.f32.mrf.mxu0
        %v1711 = vadd.f32 %v1392, %v1710
        %1712 = vmatmul.bf16.gmra.mxu0 %v1555
        %v1713 = vpop.f32.mrf.mxu0
        %v1714 = vadd.f32 %v1397, %v1713
        %v1715 = vpop.f32.mrf.mxu0
        %v1716 = vadd.f32 %v1402, %v1715
        %1717 = vmatmul.bf16.gmra.mxu0 %v1556
        %v1718 = vpop.f32.mrf.mxu0
        %v1719 = vadd.f32 %v1407, %v1718
        %v1720 = vpop.f32.mrf.mxu0
        %v1721 = vadd.f32 %v1412, %v1720
        %1722 = vmatmul.bf16.gmra.mxu0 %v1557
        %v1723 = vpop.f32.mrf.mxu0
        %v1724 = vadd.f32 %v1417, %v1723
        %v1725 = vpop.f32.mrf.mxu0
        %v1726 = vadd.f32 %v1422, %v1725
        %1727 = vmatmul.bf16.gmra.mxu0 %v1558
        %v1728 = vpop.f32.mrf.mxu0
        %v1729 = vadd.f32 %v1427, %v1728
        %v1730 = vpop.f32.mrf.mxu0
        %v1731 = vadd.f32 %v1432, %v1730
        %1732 = vmatmul.bf16.gmra.mxu0 %v1559
        %v1733 = vpop.f32.mrf.mxu0
        %v1734 = vadd.f32 %v1437, %v1733
        %v1735 = vpop.f32.mrf.mxu0
        %v1736 = vadd.f32 %v1442, %v1735
        %1737 = vmatmul.bf16.gmra.mxu0 %v1560
        %v1738 = vpop.f32.mrf.mxu0
        %v1739 = vadd.f32 %v1447, %v1738
        %v1740 = vpop.f32.mrf.mxu0
        %v1741 = vadd.f32 %v1452, %v1740
        %1742 = vmatmul.bf16.gmra.mxu0 %v1561
        %v1743 = vpop.f32.mrf.mxu0
        %v1744 = vadd.f32 %v1457, %v1743
        %v1745 = vpop.f32.mrf.mxu0
        %v1746 = vadd.f32 %v1462, %v1745
        %1747 = vmatmul.bf16.gmra.mxu0 %v1562
        %v1748 = vpop.f32.mrf.mxu0
        %v1749 = vadd.f32 %v1467, %v1748
        %v1750 = vpop.f32.mrf.mxu0
        %v1751 = vadd.f32 %v1472, %v1750
        %1752 = vmatmul.bf16.gmra.mxu0 %v1563
        %v1753 = vpop.f32.mrf.mxu0
        %v1754 = vadd.f32 %v1477, %v1753
        %v1755 = vpop.f32.mrf.mxu0
        %v1756 = vadd.f32 %v1482, %v1755
        %1757 = vdwg.mxu0
        %v1758 = vmax.f32 %v1590, 0.0
        %v1759 = vmax.f32 %v1679, 0.0
        %v1760 = vmax.f32 %v1592, 0.0
        %v1761 = vmax.f32 %v1681, 0.0
        %v1762 = vmax.f32 %v1595, 0.0
        %v1763 = vmax.f32 %v1684, 0.0
        %v1764 = vmax.f32 %v1597, 0.0
        %v1765 = vmax.f32 %v1686, 0.0
        %v1766 = vmax.f32 %v1600, 0.0
        %v1767 = vmax.f32 %v1689, 0.0
        %v1768 = vmax.f32 %v1602, 0.0
        %v1769 = vmax.f32 %v1691, 0.0
        %v1770 = vmax.f32 %v1605, 0.0
        %v1771 = vmax.f32 %v1694, 0.0
        %v1772 = vmax.f32 %v1607, 0.0
        %v1773 = vmax.f32 %v1696, 0.0
        %v1774 = vmax.f32 %v1610, 0.0
        %v1775 = vmax.f32 %v1699, 0.0
        %v1776 = vmax.f32 %v1612, 0.0
        %v1777 = vmax.f32 %v1701, 0.0
        %v1778 = vmax.f32 %v1615, 0.0
        %v1779 = vmax.f32 %v1704, 0.0
        %v1780 = vmax.f32 %v1617, 0.0
        %v1781 = vmax.f32 %v1706, 0.0
        %v1782 = vmax.f32 %v1620, 0.0
        %v1783 = vmax.f32 %v1709, 0.0
        %v1784 = vmax.f32 %v1622, 0.0
        %v1785 = vmax.f32 %v1711, 0.0
        %v1786 = vmax.f32 %v1625, 0.0
        %v1787 = vmax.f32 %v1714, 0.0
        %v1788 = vmax.f32 %v1627, 0.0
        %v1789 = vmax.f32 %v1716, 0.0
        %v1790 = vmax.f32 %v1630, 0.0
        %v1791 = vmax.f32 %v1719, 0.0
        %v1792 = vmax.f32 %v1632, 0.0
        %v1793 = vmax.f32 %v1721, 0.0
        %v1794 = vmax.f32 %v1635, 0.0
        %v1795 = vmax.f32 %v1724, 0.0
        %v1796 = vmax.f32 %v1637, 0.0
        %v1797 = vmax.f32 %v1726, 0.0
        %v1798 = vmax.f32 %v1640, 0.0
        %v1799 = vmax.f32 %v1729, 0.0
        %v1800 = vmax.f32 %v1642, 0.0
        %v1801 = vmax.f32 %v1731, 0.0
        %v1802 = vmax.f32 %v1645, 0.0
        %v1803 = vmax.f32 %v1734, 0.0
        %v1804 = vmax.f32 %v1647, 0.0
        %v1805 = vmax.f32 %v1736, 0.0
        %v1806 = vmax.f32 %v1650, 0.0
        %v1807 = vmax.f32 %v1739, 0.0
        %v1808 = vmax.f32 %v1652, 0.0
        %v1809 = vmax.f32 %v1741, 0.0
        %v1810 = vmax.f32 %v1655, 0.0
        %v1811 = vmax.f32 %v1744, 0.0
        %v1812 = vmax.f32 %v1657, 0.0
        %v1813 = vmax.f32 %v1746, 0.0
        %v1814 = vmax.f32 %v1660, 0.0
        %v1815 = vmax.f32 %v1749, 0.0
        %v1816 = vmax.f32 %v1662, 0.0
        %v1817 = vmax.f32 %v1751, 0.0
        %v1818 = vmax.f32 %v1665, 0.0
        %v1819 = vmax.f32 %v1754, 0.0
        %v1820 = vmax.f32 %v1667, 0.0
        %v1821 = vmax.f32 %v1756, 0.0
        %1822 = vst [vmem:[%s400] sm:$0xff] %v1758
        %1823 = vst [vmem:[%s400 + $0x8] sm:$0xff] %v1759
        %1824 = vst [vmem:[%s400 + $0x10] sm:$0xff] %v1760
        %1825 = vst [vmem:[%s400 + $0x18] sm:$0xff] %v1761
        %1826 = vst [vmem:[%s400 + $0x20] sm:$0xff] %v1762
        %1827 = vst [vmem:[%s400 + $0x28] sm:$0xff] %v1763
        %1828 = vst [vmem:[%s400 + $0x30] sm:$0xff] %v1764
        %1829 = vst [vmem:[%s400 + $0x38] sm:$0xff] %v1765
        %1830 = vst [vmem:[%s400 + $0x40] sm:$0xff] %v1766
        %1831 = vst [vmem:[%s400 + $0x48] sm:$0xff] %v1767
        %1832 = vst [vmem:[%s400 + $0x50] sm:$0xff] %v1768
        %1833 = vst [vmem:[%s400 + $0x58] sm:$0xff] %v1769
        %1834 = vst [vmem:[%s400 + $0x60] sm:$0xff] %v1770
        %1835 = vst [vmem:[%s400 + $0x68] sm:$0xff] %v1771
        %1836 = vst [vmem:[%s400 + $0x70] sm:$0xff] %v1772
        %1837 = vst [vmem:[%s400 + $0x78] sm:$0xff] %v1773
        %1838 = vst [vmem:[%s400 + $0x80] sm:$0xff] %v1774
        %1839 = vst [vmem:[%s400 + $0x88] sm:$0xff] %v1775
        %1840 = vst [vmem:[%s400 + $0x90] sm:$0xff] %v1776
        %1841 = vst [vmem:[%s400 + $0x98] sm:$0xff] %v1777
        %1842 = vst [vmem:[%s400 + $0xa0] sm:$0xff] %v1778
        %1843 = vst [vmem:[%s400 + $0xa8] sm:$0xff] %v1779
        %1844 = vst [vmem:[%s400 + $0xb0] sm:$0xff] %v1780
        %1845 = vst [vmem:[%s400 + $0xb8] sm:$0xff] %v1781
        %1846 = vst [vmem:[%s400 + $0xc0] sm:$0xff] %v1782
        %1847 = vst [vmem:[%s400 + $0xc8] sm:$0xff] %v1783
        %1848 = vst [vmem:[%s400 + $0xd0] sm:$0xff] %v1784
        %1849 = vst [vmem:[%s400 + $0xd8] sm:$0xff] %v1785
        %1850 = vst [vmem:[%s400 + $0xe0] sm:$0xff] %v1786
        %1851 = vst [vmem:[%s400 + $0xe8] sm:$0xff] %v1787
        %1852 = vst [vmem:[%s400 + $0xf0] sm:$0xff] %v1788
        %1853 = vst [vmem:[%s400 + $0xf8] sm:$0xff] %v1789
        %1854 = vst [vmem:[%s400 + $0x100] sm:$0xff] %v1790
        %1855 = vst [vmem:[%s400 + $0x108] sm:$0xff] %v1791
        %1856 = vst [vmem:[%s400 + $0x110] sm:$0xff] %v1792
        %1857 = vst [vmem:[%s400 + $0x118] sm:$0xff] %v1793
        %1858 = vst [vmem:[%s400 + $0x120] sm:$0xff] %v1794
        %1859 = vst [vmem:[%s400 + $0x128] sm:$0xff] %v1795
        %1860 = vst [vmem:[%s400 + $0x130] sm:$0xff] %v1796
        %1861 = vst [vmem:[%s400 + $0x138] sm:$0xff] %v1797
        %1862 = vst [vmem:[%s400 + $0x140] sm:$0xff] %v1798
        %1863 = vst [vmem:[%s400 + $0x148] sm:$0xff] %v1799
        %1864 = vst [vmem:[%s400 + $0x150] sm:$0xff] %v1800
        %1865 = vst [vmem:[%s400 + $0x158] sm:$0xff] %v1801
        %1866 = vst [vmem:[%s400 + $0x160] sm:$0xff] %v1802
        %1867 = vst [vmem:[%s400 + $0x168] sm:$0xff] %v1803
        %1868 = vst [vmem:[%s400 + $0x170] sm:$0xff] %v1804
        %1869 = vst [vmem:[%s400 + $0x178] sm:$0xff] %v1805
        %1870 = vst [vmem:[%s400 + $0x180] sm:$0xff] %v1806
        %1871 = vst [vmem:[%s400 + $0x188] sm:$0xff] %v1807
        %1872 = vst [vmem:[%s400 + $0x190] sm:$0xff] %v1808
        %1873 = vst [vmem:[%s400 + $0x198] sm:$0xff] %v1809
        %1874 = vst [vmem:[%s400 + $0x1a0] sm:$0xff] %v1810
        %1875 = vst [vmem:[%s400 + $0x1a8] sm:$0xff] %v1811
        %1876 = vst [vmem:[%s400 + $0x1b0] sm:$0xff] %v1812
        %1877 = vst [vmem:[%s400 + $0x1b8] sm:$0xff] %v1813
        %1878 = vst [vmem:[%s400 + $0x1c0] sm:$0xff] %v1814
        %1879 = vst [vmem:[%s400 + $0x1c8] sm:$0xff] %v1815
        %1880 = vst [vmem:[%s400 + $0x1d0] sm:$0xff] %v1816
        %1881 = vst [vmem:[%s400 + $0x1d8] sm:$0xff] %v1817
        %1882 = vst [vmem:[%s400 + $0x1e0] sm:$0xff] %v1818
        %1883 = vst [vmem:[%s400 + $0x1e8] sm:$0xff] %v1819
        %1884 = vst [vmem:[%s400 + $0x1f0] sm:$0xff] %v1820
        %1885 = vst [vmem:[%s400 + $0x1f8] sm:$0xff] %v1821
        %s1886 = sand.u32 %s282, 1
        %s1887 = sand.u32 %s282, 1
        %s1888 = smul.addr %s1887, 512
        %s1889 = scalar_lea.vmem [#allocation2], %s1888
        // Predicated region
        $region65: #{base_pointnet_forward.1} parent=63 // pred_check
          %p1890 = pneg %p292
        $region66: #{base_pointnet_forward.1} parent=63 // pred_check_branch
          %1892 = sbr.rel (%p1890) target = $region68
        $region67: #{base_pointnet_forward.1} parent=63 // pred_region
          %s1893 = smul.u32 2, %s27
          %s1894 = smul.addr %s26, 128
          %s1895 = sadd.s32 %s1893, %s1894
          %s1896 = smul.addr %s1895, 8
          %s1897 = scalar_lea.vmem %s11, %s1896
          // Predicated region
          $region69: #{base_pointnet_forward.1} parent=67 // pred_check
            _
          $region70: #{base_pointnet_forward.1} parent=67 // pred_check_branch
            %1899 = sbr.rel (0) target = $region72
          $region71: #{base_pointnet_forward.1} parent=67 // pred_region
            // Predicated region
            $region73: #{base_pointnet_forward.1} parent=71 // pred_check
              _
            $region74: #{base_pointnet_forward.1} parent=71 // pred_check_branch
              %1901 = sbr.rel (0) target = $region76
            $region75: #{base_pointnet_forward.1} parent=71 // pred_region
              loop: start=0, step=1, limit=1
              $region77: #{base_pointnet_forward.1} parent=75 // loop_pre_header
                _
              $region78: #{base_pointnet_forward.1} parent=75 // loop_header
                %s1903 = sphi 0, %s1907
                %p1904 = scmp.ge.s32.totalorder %s1903, 1
                %s1908 = sphi %s1889, %s1889
                %s1909 = sphi %s1897, %s1897
              $region79: #{base_pointnet_forward.1} parent=75 // loop_header_branch
                %1906 = sbr.rel (%p1904) target = $region83
              $region80: #{base_pointnet_forward.1} parent=75 // loop_body
                %v1910 = vld [vmem:[%s1908] sm:$0xff]
                %1911 = vst [vmem:[%s1909] sm:$0xff] %v1910
                %v1912 = vld [vmem:[%s1908 + $0x8] sm:$0xff]
                %1913 = vst [vmem:[%s1909 + $0x8] sm:$0xff] %v1912
                %v1914 = vld [vmem:[%s1908 + $0x10] sm:$0xff]
                %1915 = vst [vmem:[%s1909 + $0x20] sm:$0xff] %v1914
                %v1916 = vld [vmem:[%s1908 + $0x18] sm:$0xff]
                %1917 = vst [vmem:[%s1909 + $0x28] sm:$0xff] %v1916
                %v1918 = vld [vmem:[%s1908 + $0x20] sm:$0xff]
                %1919 = vst [vmem:[%s1909 + $0x40] sm:$0xff] %v1918
                %v1920 = vld [vmem:[%s1908 + $0x28] sm:$0xff]
                %1921 = vst [vmem:[%s1909 + $0x48] sm:$0xff] %v1920
                %v1922 = vld [vmem:[%s1908 + $0x30] sm:$0xff]
                %1923 = vst [vmem:[%s1909 + $0x60] sm:$0xff] %v1922
                %v1924 = vld [vmem:[%s1908 + $0x38] sm:$0xff]
                %1925 = vst [vmem:[%s1909 + $0x68] sm:$0xff] %v1924
                %v1926 = vld [vmem:[%s1908 + $0x40] sm:$0xff]
                %1927 = vst [vmem:[%s1909 + $0x80] sm:$0xff] %v1926
                %v1928 = vld [vmem:[%s1908 + $0x48] sm:$0xff]
                %1929 = vst [vmem:[%s1909 + $0x88] sm:$0xff] %v1928
                %v1930 = vld [vmem:[%s1908 + $0x50] sm:$0xff]
                %1931 = vst [vmem:[%s1909 + $0xa0] sm:$0xff] %v1930
                %v1932 = vld [vmem:[%s1908 + $0x58] sm:$0xff]
                %1933 = vst [vmem:[%s1909 + $0xa8] sm:$0xff] %v1932
                %v1934 = vld [vmem:[%s1908 + $0x60] sm:$0xff]
                %1935 = vst [vmem:[%s1909 + $0xc0] sm:$0xff] %v1934
                %v1936 = vld [vmem:[%s1908 + $0x68] sm:$0xff]
                %1937 = vst [vmem:[%s1909 + $0xc8] sm:$0xff] %v1936
                %v1938 = vld [vmem:[%s1908 + $0x70] sm:$0xff]
                %1939 = vst [vmem:[%s1909 + $0xe0] sm:$0xff] %v1938
                %v1940 = vld [vmem:[%s1908 + $0x78] sm:$0xff]
                %1941 = vst [vmem:[%s1909 + $0xe8] sm:$0xff] %v1940
                %v1942 = vld [vmem:[%s1908 + $0x80] sm:$0xff]
                %1943 = vst [vmem:[%s1909 + $0x100] sm:$0xff] %v1942
                %v1944 = vld [vmem:[%s1908 + $0x88] sm:$0xff]
                %1945 = vst [vmem:[%s1909 + $0x108] sm:$0xff] %v1944
                %v1946 = vld [vmem:[%s1908 + $0x90] sm:$0xff]
                %1947 = vst [vmem:[%s1909 + $0x120] sm:$0xff] %v1946
                %v1948 = vld [vmem:[%s1908 + $0x98] sm:$0xff]
                %1949 = vst [vmem:[%s1909 + $0x128] sm:$0xff] %v1948
                %v1950 = vld [vmem:[%s1908 + $0xa0] sm:$0xff]
                %1951 = vst [vmem:[%s1909 + $0x140] sm:$0xff] %v1950
                %v1952 = vld [vmem:[%s1908 + $0xa8] sm:$0xff]
                %1953 = vst [vmem:[%s1909 + $0x148] sm:$0xff] %v1952
                %v1954 = vld [vmem:[%s1908 + $0xb0] sm:$0xff]
                %1955 = vst [vmem:[%s1909 + $0x160] sm:$0xff] %v1954
                %v1956 = vld [vmem:[%s1908 + $0xb8] sm:$0xff]
                %1957 = vst [vmem:[%s1909 + $0x168] sm:$0xff] %v1956
                %v1958 = vld [vmem:[%s1908 + $0xc0] sm:$0xff]
                %1959 = vst [vmem:[%s1909 + $0x180] sm:$0xff] %v1958
                %v1960 = vld [vmem:[%s1908 + $0xc8] sm:$0xff]
                %1961 = vst [vmem:[%s1909 + $0x188] sm:$0xff] %v1960
                %v1962 = vld [vmem:[%s1908 + $0xd0] sm:$0xff]
                %1963 = vst [vmem:[%s1909 + $0x1a0] sm:$0xff] %v1962
                %v1964 = vld [vmem:[%s1908 + $0xd8] sm:$0xff]
                %1965 = vst [vmem:[%s1909 + $0x1a8] sm:$0xff] %v1964
                %v1966 = vld [vmem:[%s1908 + $0xe0] sm:$0xff]
                %1967 = vst [vmem:[%s1909 + $0x1c0] sm:$0xff] %v1966
                %v1968 = vld [vmem:[%s1908 + $0xe8] sm:$0xff]
                %1969 = vst [vmem:[%s1909 + $0x1c8] sm:$0xff] %v1968
                %v1970 = vld [vmem:[%s1908 + $0xf0] sm:$0xff]
                %1971 = vst [vmem:[%s1909 + $0x1e0] sm:$0xff] %v1970
                %v1972 = vld [vmem:[%s1908 + $0xf8] sm:$0xff]
                %1973 = vst [vmem:[%s1909 + $0x1e8] sm:$0xff] %v1972
                %v1974 = vld [vmem:[%s1908 + $0x100] sm:$0xff]
                %1975 = vst [vmem:[%s1909 + $0x200] sm:$0xff] %v1974
                %v1976 = vld [vmem:[%s1908 + $0x108] sm:$0xff]
                %1977 = vst [vmem:[%s1909 + $0x208] sm:$0xff] %v1976
                %v1978 = vld [vmem:[%s1908 + $0x110] sm:$0xff]
                %1979 = vst [vmem:[%s1909 + $0x220] sm:$0xff] %v1978
                %v1980 = vld [vmem:[%s1908 + $0x118] sm:$0xff]
                %1981 = vst [vmem:[%s1909 + $0x228] sm:$0xff] %v1980
                %v1982 = vld [vmem:[%s1908 + $0x120] sm:$0xff]
                %1983 = vst [vmem:[%s1909 + $0x240] sm:$0xff] %v1982
                %v1984 = vld [vmem:[%s1908 + $0x128] sm:$0xff]
                %1985 = vst [vmem:[%s1909 + $0x248] sm:$0xff] %v1984
                %v1986 = vld [vmem:[%s1908 + $0x130] sm:$0xff]
                %1987 = vst [vmem:[%s1909 + $0x260] sm:$0xff] %v1986
                %v1988 = vld [vmem:[%s1908 + $0x138] sm:$0xff]
                %1989 = vst [vmem:[%s1909 + $0x268] sm:$0xff] %v1988
                %v1990 = vld [vmem:[%s1908 + $0x140] sm:$0xff]
                %1991 = vst [vmem:[%s1909 + $0x280] sm:$0xff] %v1990
                %v1992 = vld [vmem:[%s1908 + $0x148] sm:$0xff]
                %1993 = vst [vmem:[%s1909 + $0x288] sm:$0xff] %v1992
                %v1994 = vld [vmem:[%s1908 + $0x150] sm:$0xff]
                %1995 = vst [vmem:[%s1909 + $0x2a0] sm:$0xff] %v1994
                %v1996 = vld [vmem:[%s1908 + $0x158] sm:$0xff]
                %1997 = vst [vmem:[%s1909 + $0x2a8] sm:$0xff] %v1996
                %v1998 = vld [vmem:[%s1908 + $0x160] sm:$0xff]
                %1999 = vst [vmem:[%s1909 + $0x2c0] sm:$0xff] %v1998
                %v2000 = vld [vmem:[%s1908 + $0x168] sm:$0xff]
                %2001 = vst [vmem:[%s1909 + $0x2c8] sm:$0xff] %v2000
                %v2002 = vld [vmem:[%s1908 + $0x170] sm:$0xff]
                %2003 = vst [vmem:[%s1909 + $0x2e0] sm:$0xff] %v2002
                %v2004 = vld [vmem:[%s1908 + $0x178] sm:$0xff]
                %2005 = vst [vmem:[%s1909 + $0x2e8] sm:$0xff] %v2004
                %v2006 = vld [vmem:[%s1908 + $0x180] sm:$0xff]
                %2007 = vst [vmem:[%s1909 + $0x300] sm:$0xff] %v2006
                %v2008 = vld [vmem:[%s1908 + $0x188] sm:$0xff]
                %2009 = vst [vmem:[%s1909 + $0x308] sm:$0xff] %v2008
                %v2010 = vld [vmem:[%s1908 + $0x190] sm:$0xff]
                %2011 = vst [vmem:[%s1909 + $0x320] sm:$0xff] %v2010
                %v2012 = vld [vmem:[%s1908 + $0x198] sm:$0xff]
                %2013 = vst [vmem:[%s1909 + $0x328] sm:$0xff] %v2012
                %v2014 = vld [vmem:[%s1908 + $0x1a0] sm:$0xff]
                %2015 = vst [vmem:[%s1909 + $0x340] sm:$0xff] %v2014
                %v2016 = vld [vmem:[%s1908 + $0x1a8] sm:$0xff]
                %2017 = vst [vmem:[%s1909 + $0x348] sm:$0xff] %v2016
                %v2018 = vld [vmem:[%s1908 + $0x1b0] sm:$0xff]
                %2019 = vst [vmem:[%s1909 + $0x360] sm:$0xff] %v2018
                %v2020 = vld [vmem:[%s1908 + $0x1b8] sm:$0xff]
                %2021 = vst [vmem:[%s1909 + $0x368] sm:$0xff] %v2020
                %v2022 = vld [vmem:[%s1908 + $0x1c0] sm:$0xff]
                %2023 = vst [vmem:[%s1909 + $0x380] sm:$0xff] %v2022
                %v2024 = vld [vmem:[%s1908 + $0x1c8] sm:$0xff]
                %2025 = vst [vmem:[%s1909 + $0x388] sm:$0xff] %v2024
                %v2026 = vld [vmem:[%s1908 + $0x1d0] sm:$0xff]
                %2027 = vst [vmem:[%s1909 + $0x3a0] sm:$0xff] %v2026
                %v2028 = vld [vmem:[%s1908 + $0x1d8] sm:$0xff]
                %2029 = vst [vmem:[%s1909 + $0x3a8] sm:$0xff] %v2028
                %v2030 = vld [vmem:[%s1908 + $0x1e0] sm:$0xff]
                %2031 = vst [vmem:[%s1909 + $0x3c0] sm:$0xff] %v2030
                %v2032 = vld [vmem:[%s1908 + $0x1e8] sm:$0xff]
                %2033 = vst [vmem:[%s1909 + $0x3c8] sm:$0xff] %v2032
                %v2034 = vld [vmem:[%s1908 + $0x1f0] sm:$0xff]
                %2035 = vst [vmem:[%s1909 + $0x3e0] sm:$0xff] %v2034
                %v2036 = vld [vmem:[%s1908 + $0x1f8] sm:$0xff]
                %2037 = vst [vmem:[%s1909 + $0x3e8] sm:$0xff] %v2036
              $region81: #{base_pointnet_forward.1} parent=75 // loop_footer
                %s1907 = sadd.s32 1, %s1903
              $region82: #{base_pointnet_forward.1} parent=75 // loop_footer_branch
                %1902 = sbr.rel target = $region78
              $region83: #{base_pointnet_forward.1} parent=75 // loop_exit
                _
            $region76: #{base_pointnet_forward.1} parent=71 // pred_fallthru
              _
            // Predicated region
            $region84: #{base_pointnet_forward.1} parent=71 // pred_check
              _
            $region85: #{base_pointnet_forward.1} parent=71 // pred_check_branch
              %2039 = sbr.rel target = $region87
            $region86: #{base_pointnet_forward.1} parent=71 // pred_region
              _
            $region87: #{base_pointnet_forward.1} parent=71 // pred_fallthru
              _
          $region72: #{base_pointnet_forward.1} parent=67 // pred_fallthru
            _
          %2040 = vnop
        $region68: #{base_pointnet_forward.1} parent=63 // pred_fallthru
          _
      $region64: #{base_pointnet_forward.1} parent=5 // pred_fallthru
        _
      %p2041 = scmp.le.s32.totalorder 2, %s17
      // Predicated region
      $region88: #{base_pointnet_forward.1} parent=5 // pred_check
        %p2042 = pneg %p2041
      $region89: #{base_pointnet_forward.1} parent=5 // pred_check_branch
        %2044 = sbr.rel (%p2042) target = $region91
      $region90: #{base_pointnet_forward.1} parent=5 // pred_region
        %s2045 = ssub.s32 %s17, 2
        // Predicated region
        $region92: #{base_pointnet_forward.1} parent=90 // pred_check
          %p2046 = pneg %p298
        $region93: #{base_pointnet_forward.1} parent=90 // pred_check_branch
          %2048 = sbr.rel (%p2046) target = $region95
        $region94: #{base_pointnet_forward.1} parent=90 // pred_region
          %s2049 = sand.u32 %s283, 1
          %s2050 = sand.u32 %s283, 1
          %s2051 = smul.addr %s2050, 512
          %s2052 = scalar_lea.vmem [#allocation2], %s2051
        $region95: #{base_pointnet_forward.1} parent=90 // pred_fallthru
          _
      $region91: #{base_pointnet_forward.1} parent=5 // pred_fallthru
        _
    $region6: #{base_pointnet_forward.1} parent=1 // loop_footer
      %s21 = sadd.s32 1, %s17
    $region7: #{base_pointnet_forward.1} parent=1 // loop_footer_branch
      %16 = sbr.rel target = $region3
    $region8: #{base_pointnet_forward.1} parent=1 // loop_exit
      _

</llo_original>
